<compile_context>
chip_gen: v7x
topology: tpu7x:2x2x1
jax: 0.10.0
libtpu: 0.0.40
codegen_flags: <defaults>
</compile_context>

<pallas_src>
import re

import jax
import jax.numpy as jnp
from jax.experimental import pallas as pl
from jax.experimental.pallas import tpu as pltpu


def _cross_attn_kernel(n_tokens, c_dim):
    def kernel(xcls_ref, xtok_ref, wq_ref, wkv_ref, wp_ref, bp_ref, hm_ref,
               o_ref):
        x_cls = xcls_ref[...]                                     # (BT, C)    bf16
        x_tok = xtok_ref[...]                                     # (BT*N, C)  bf16

        # Projections: bf16 MXU matmuls, f32 accumulation (PyTorch Linear
        # y = x @ W^T; weights arrive pre-transposed / pre-fused to (in, out)).
        q = jnp.dot(x_cls, wq_ref[...],
                    preferred_element_type=jnp.float32)           # (BT, C)
        kv = jnp.dot(x_tok, wkv_ref[...],
                     preferred_element_type=jnp.float32)          # (BT*N, 2C)

        bt = q.shape[0]
        n, c = n_tokens, c_dim
        # Static lane slices at the 128 boundary (free), then an (8,128)-aligned
        # leading-dim regroup (free).
        k3 = kv[:, :c].reshape(bt, n, c)                          # (BT, N, C) f32
        v3 = kv[:, c:].reshape(bt, n, c)                          # (BT, N, C) f32

        # Per-head logits broadcast to full lane width C:
        #   logits[b, t, c] = scale * sum_{c' in head(c)} q[b, c'] * k[b, t, c']
        # hm is the bf16 block-diagonal head mask with the softmax scale folded
        # in; prod is cast to bf16 so this is a plain bf16 MXU matmul with f32
        # accumulation (no f32xf32 multi-pass).
        prod = (k3 * q[:, None, :]).reshape(bt * n, c).astype(jnp.bfloat16)
        logits = jnp.dot(prod, hm_ref[...],
                         preferred_element_type=jnp.float32).reshape(bt, n, c)

        # Softmax over the token axis (per batch & head), f32. Columns within a
        # head carry (numerically identical) per-head logits, so the per-column
        # softmax matches the per-head softmax of the reference.
        # NOTE: at real ViT sizes (large N*C) the exp below is head_dim-times
        # redundant; if a bundle dump shows the EUP saturating, compact the
        # logits to one lane per head with a (C, num_heads) selection matmul
        # before the exp and broadcast the weights back with an hm-style matmul.
        m = jnp.max(logits, axis=1, keepdims=True)                # (BT, 1, C)
        e = jnp.exp(logits - m)                                   # (BT, N, C) f32
        denom = jnp.sum(e, axis=1)                                # (BT, C)
        acc = jnp.sum(e * v3, axis=1)                             # (BT, C)
        out = acc * pl.reciprocal(denom, approx=True)             # EUP, not VPU

        # Output projection (bf16 MXU) + bias (f32); store in final dtype.
        y = jnp.dot(out.astype(jnp.bfloat16), wp_ref[...],
                    preferred_element_type=jnp.float32) + bp_ref[...]
        o_ref[...] = y.astype(o_ref.dtype)

    return kernel


def _tpu_generation():
    """Best-effort TPU generation (5 / 6 / 7 ...); 0 if unknown."""
    try:
        kind = jax.devices()[0].device_kind.lower()
    except Exception:
        return 0
    m = re.search(r"(\d+)", kind)
    return int(m.group(1)) if m else 0


def _pick_batch_tile(batch, n_tokens):
    """Generation-aware batch tile.

    * v6e/v7x (256-wide MXU): target 256 LHS rows per grid step.
    * v5e and older (128-wide MXU): 128 rows per step is already full.
    * v7x (2 TensorCores): keep grid >= 4 so each core has >= 2 pipelined
      steps; otherwise keep grid >= 2 when possible.
    """
    gen = _tpu_generation()
    target_rows = 256 if gen >= 6 else 128
    min_grid = 4 if gen >= 7 else 2

    cap = max(1, target_rows // max(n_tokens, 1))
    divisors = [d for d in range(1, batch + 1) if batch % d == 0]
    for mg in (min_grid, 2, 1):
        cand = [d for d in divisors if d <= cap and batch // d >= mg]
        if cand:
            return max(cand)
    return 1


def _const_spec(shape):
    """Grid-invariant operand: single-buffered (double-buffering a block whose
    index never changes only wastes VMEM)."""
    index_map = lambda b: tuple(0 for _ in shape)
    try:
        return pl.BlockSpec(shape, index_map, pipeline_mode=pl.Buffered(1))
    except (AttributeError, TypeError):  # older jax without pipeline_mode
        return pl.BlockSpec(shape, index_map)


def prepare_cross_attention_params(wq, wk, wv, wp, bp, num_heads):
    """Per-module prep, done ONCE (not per forward call): transpose + bf16 cast
    of weights, wk/wv fusion, scale-folded bf16 head mask."""
    C = wq.shape[0]
    head_dim = C // num_heads
    scale = head_dim ** -0.5

    wq_t = wq.T.astype(jnp.bfloat16)                              # (C, C)
    wkv_t = jnp.concatenate([wk.T, wv.T], axis=1).astype(jnp.bfloat16)  # (C, 2C)
    wp_t = wp.T.astype(jnp.bfloat16)                              # (C, C)
    bp_row = bp.reshape(1, C).astype(jnp.float32)                 # (1, C)

    # Block-diagonal head mask (C, C) with the softmax scale folded in.
    # scale = head_dim**-0.5 is a power of two for power-of-two head_dim
    # (0.25 here), so it is exact in bf16.
    head_id = jnp.arange(C) // head_dim
    hm = ((head_id[:, None] == head_id[None, :]).astype(jnp.float32)
          * scale).astype(jnp.bfloat16)

    return {"wq_t": wq_t, "wkv_t": wkv_t, "wp_t": wp_t,
            "bp_row": bp_row, "hm": hm, "num_heads": num_heads}


def cross_attention_pallas(x, params, b_tile=None):
    """x: (B, N, C) activations (bf16 preferred); params from
    prepare_cross_attention_params. Returns (B, 1, C) in x.dtype."""
    B, N, C = x.shape
    assert N % 8 == 0, "pad tokens to a multiple of 8 and mask padded keys"
    assert C % 128 == 0, "C must be lane-aligned (multiple of 128)"

    if b_tile is None:
        b_tile = _pick_batch_tile(B, N)
    assert B % b_tile == 0
    grid = (B // b_tile,)

    # Accept bf16 activations directly (no extra HBM round trip); only cast if
    # the caller handed us something else.
    x_bf = x if x.dtype == jnp.bfloat16 else x.astype(jnp.bfloat16)
    x_tok = x_bf.reshape(B * N, C)      # all tokens, flattened, for the K/V proj
    x_cls = x_bf[:, 0, :]               # CLS rows only, for the Q proj

    out2d = pl.pallas_call(
        _cross_attn_kernel(N, C),
        out_shape=jax.ShapeDtypeStruct((B, C), x.dtype),
        grid_spec=pltpu.PrefetchScalarGridSpec(
            num_scalar_prefetch=0,
            grid=grid,
            in_specs=[
                pl.BlockSpec((b_tile, C), lambda b: (b, 0)),        # CLS rows
                pl.BlockSpec((b_tile * N, C), lambda b: (b, 0)),    # all tokens
                _const_spec((C, C)),                                # wq^T      (bf16)
                _const_spec((C, 2 * C)),                            # [wk^T|wv^T](bf16)
                _const_spec((C, C)),                                # wp^T      (bf16)
                _const_spec((1, C)),                                # proj bias (f32)
                _const_spec((C, C)),                                # head mask (bf16)
            ],
            out_specs=pl.BlockSpec((b_tile, C), lambda b: (b, 0)),  # lane-dense slab
        ),
        compiler_params=pltpu.CompilerParams(
            dimension_semantics=("parallel",),
            vmem_limit_bytes=48 * 1024 * 1024,
        ),
    )(x_cls, x_tok, params["wq_t"], params["wkv_t"], params["wp_t"],
      params["bp_row"], params["hm"])

    return out2d.reshape(B, 1, C)


def cross_attention_ref(x, wq, wk, wv, wp, bp, num_heads):
    """Pure-JAX f32 reference mirroring the PyTorch forward."""
    B, N, C = x.shape
    hd = C // num_heads
    scale = hd ** -0.5
    q = (x[:, 0:1] @ wq.T).reshape(B, 1, num_heads, hd).transpose(0, 2, 1, 3)
    k = (x @ wk.T).reshape(B, N, num_heads, hd).transpose(0, 2, 1, 3)
    v = (x @ wv.T).reshape(B, N, num_heads, hd).transpose(0, 2, 1, 3)
    attn = (q @ jnp.swapaxes(k, -2, -1)) * scale
    attn = jax.nn.softmax(attn, axis=-1)
    out = (attn @ v).transpose(0, 2, 1, 3).reshape(B, 1, C)
    return out @ wp.T + bp


if __name__ == "__main__":
    # batch, tokens, dim, heads (head_dim = 16).  The batch tile is picked per
    # TPU generation: 16 (grid=2) on v5e/v6e, 8 (grid=4) on v7x.
    B, N, C, H = 32, 8, 128, 8

    key = jax.random.PRNGKey(0)
    kx, kq, kk, kv, kp, kb = jax.random.split(key, 6)
    # bf16 activations upstream -> no extra x->bf16 HBM pass before the kernel.
    x = jax.random.normal(kx, (B, N, C), dtype=jnp.float32).astype(jnp.bfloat16)
    # Deterministic synthetic parameters (PyTorch Linear layout: (out, in)).
    wq = jax.random.normal(kq, (C, C), dtype=jnp.float32) * 0.05
    wk = jax.random.normal(kk, (C, C), dtype=jnp.float32) * 0.05
    wv = jax.random.normal(kv, (C, C), dtype=jnp.float32) * 0.05
    wp = jax.random.normal(kp, (C, C), dtype=jnp.float32) * 0.05
    bp = jax.random.normal(kb, (C,), dtype=jnp.float32) * 0.05

    # Weight prep is computed once and reused for every forward call.
    params = prepare_cross_attention_params(wq, wk, wv, wp, bp, H)
    params = jax.tree_util.tree_map(
        lambda a: jax.block_until_ready(a) if isinstance(a, jax.Array) else a,
        params)

    out = cross_attention_pallas(x, params)
    out = jax.block_until_ready(out)

    ref = cross_attention_ref(x.astype(jnp.float32), wq, wk, wv, wp, bp, H)
    assert out.shape == (B, 1, C)
    out_f32 = out.astype(jnp.float32)
    max_err = jnp.max(jnp.abs(out_f32 - ref))
    # bf16 MXU operands / bf16 output (f32 accumulation) -> loosened tolerance
    # vs the f32 reference.
    assert jnp.allclose(out_f32, ref, atol=3e-2, rtol=3e-2), \
        f"max abs err = {max_err}"

    print("KERNEL_OK")
</pallas_src>

<mosaic_0001>
module attributes {stable_mosaic.version = 11 : i64} {
  func.func @kernel(%arg0: i32, %arg1: memref<16x128xbf16, #tpu.memory_space<vmem>>, %arg2: memref<128x128xbf16, #tpu.memory_space<vmem>>, %arg3: memref<128x128xbf16, #tpu.memory_space<vmem>>, %arg4: memref<128x256xbf16, #tpu.memory_space<vmem>>, %arg5: memref<128x128xbf16, #tpu.memory_space<vmem>>, %arg6: memref<1x128xf32, #tpu.memory_space<vmem>>, %arg7: memref<128x128xbf16, #tpu.memory_space<vmem>>, %arg8: memref<16x128xbf16, #tpu.memory_space<vmem>>) attributes {dimension_semantics = [#tpu.dimension_semantics<parallel>], iteration_bounds = array<i64: 2>, scalar_prefetch = 0 : i64, scratch_operands = 0 : i64, tpu.core_type = #tpu.core_type<tc>, window_params = [{transform_indices = @transform_0, window_bounds = array<i64: 16, 128>}, {transform_indices = @transform_1, window_bounds = array<i64: 128, 128>}, {pipeline_mode = #tpu.pipeline_mode<synchronous>, transform_indices = @transform_2, window_bounds = array<i64: 128, 128>}, {pipeline_mode = #tpu.pipeline_mode<synchronous>, transform_indices = @transform_3, window_bounds = array<i64: 128, 256>}, {pipeline_mode = #tpu.pipeline_mode<synchronous>, transform_indices = @transform_4, window_bounds = array<i64: 128, 128>}, {pipeline_mode = #tpu.pipeline_mode<synchronous>, transform_indices = @transform_5, window_bounds = array<i64: 1, 128>}, {pipeline_mode = #tpu.pipeline_mode<synchronous>, transform_indices = @transform_6, window_bounds = array<i64: 128, 128>}, {transform_indices = @transform_7, window_bounds = array<i64: 16, 128>}]} {
    %c0 = arith.constant 0 : index
    %c0_0 = arith.constant 0 : index
    %0 = vector.load %arg1[%c0, %c0_0] : memref<16x128xbf16, #tpu.memory_space<vmem>>, vector<16x128xbf16>
    %c0_1 = arith.constant 0 : index
    %c0_2 = arith.constant 0 : index
    %1 = vector.load %arg2[%c0_1, %c0_2] : memref<128x128xbf16, #tpu.memory_space<vmem>>, vector<128x128xbf16>
    %c0_3 = arith.constant 0 : index
    %c0_4 = arith.constant 0 : index
    %2 = vector.load %arg3[%c0_3, %c0_4] : memref<128x128xbf16, #tpu.memory_space<vmem>>, vector<128x128xbf16>
    %cst = arith.constant dense<0.000000e+00> : vector<16x128xf32>
    %3 = tpu.matmul %0, %2, %cst {dimension_numbers = #tpu.dot_dimension_numbers<[1], [0], [0], [1], [0, 0, 1, 1], [], []>} : vector<16x128xbf16>, vector<128x128xbf16>, vector<16x128xf32> -> vector<16x128xf32>
    %c0_5 = arith.constant 0 : index
    %c0_6 = arith.constant 0 : index
    %4 = vector.load %arg4[%c0_5, %c0_6] : memref<128x256xbf16, #tpu.memory_space<vmem>>, vector<128x256xbf16>
    %cst_7 = arith.constant dense<0.000000e+00> : vector<128x256xf32>
    %5 = tpu.matmul %1, %4, %cst_7 {dimension_numbers = #tpu.dot_dimension_numbers<[1], [0], [0], [1], [0, 0, 1, 1], [], []>} : vector<128x128xbf16>, vector<128x256xbf16>, vector<128x256xf32> -> vector<128x256xf32>
    %6 = vector.extract_strided_slice %5 {offsets = [0, 0], sizes = [128, 128], strides = [1, 1]} : vector<128x256xf32> to vector<128x128xf32>
    %7 = vector.shape_cast %6 : vector<128x128xf32> to vector<16x8x128xf32>
    %8 = vector.extract_strided_slice %5 {offsets = [0, 128], sizes = [128, 128], strides = [1, 1]} : vector<128x256xf32> to vector<128x128xf32>
    %9 = vector.shape_cast %8 : vector<128x128xf32> to vector<16x8x128xf32>
    %10 = vector.shape_cast %3 : vector<16x128xf32> to vector<16x1x128xf32>
    %11 = vector.broadcast %10 : vector<16x1x128xf32> to vector<16x8x128xf32>
    %12 = arith.mulf %7, %11 : vector<16x8x128xf32>
    %13 = vector.shape_cast %12 : vector<16x8x128xf32> to vector<128x128xf32>
    %14 = arith.truncf %13 : vector<128x128xf32> to vector<128x128xbf16>
    %c0_8 = arith.constant 0 : index
    %c0_9 = arith.constant 0 : index
    %15 = vector.load %arg7[%c0_8, %c0_9] : memref<128x128xbf16, #tpu.memory_space<vmem>>, vector<128x128xbf16>
    %cst_10 = arith.constant dense<0.000000e+00> : vector<128x128xf32>
    %16 = tpu.matmul %14, %15, %cst_10 {dimension_numbers = #tpu.dot_dimension_numbers<[1], [0], [0], [1], [0, 0, 1, 1], [], []>} : vector<128x128xbf16>, vector<128x128xbf16>, vector<128x128xf32> -> vector<128x128xf32>
    %17 = vector.shape_cast %16 : vector<128x128xf32> to vector<16x8x128xf32>
    %cst_11 = arith.constant dense<0xFF800000> : vector<16x128xf32>
    %18 = vector.multi_reduction <maximumf>, %17, %cst_11 [1] : vector<16x8x128xf32> to vector<16x128xf32>
    %19 = vector.shape_cast %18 : vector<16x128xf32> to vector<16x1x128xf32>
    %20 = vector.broadcast %19 : vector<16x1x128xf32> to vector<16x8x128xf32>
    %21 = arith.subf %17, %20 : vector<16x8x128xf32>
    %22 = math.exp %21 : vector<16x8x128xf32>
    %cst_12 = arith.constant dense<0.000000e+00> : vector<16x128xf32>
    %23 = vector.multi_reduction <add>, %22, %cst_12 [1] : vector<16x8x128xf32> to vector<16x128xf32>
    %24 = arith.mulf %22, %9 : vector<16x8x128xf32>
    %cst_13 = arith.constant dense<0.000000e+00> : vector<16x128xf32>
    %25 = vector.multi_reduction <add>, %24, %cst_13 [1] : vector<16x8x128xf32> to vector<16x128xf32>
    %26 = tpu.reciprocal %23 {approx = true} : vector<16x128xf32> -> vector<16x128xf32>
    %27 = arith.mulf %25, %26 : vector<16x128xf32>
    %28 = arith.truncf %27 : vector<16x128xf32> to vector<16x128xbf16>
    %c0_14 = arith.constant 0 : index
    %c0_15 = arith.constant 0 : index
    %29 = vector.load %arg5[%c0_14, %c0_15] : memref<128x128xbf16, #tpu.memory_space<vmem>>, vector<128x128xbf16>
    %cst_16 = arith.constant dense<0.000000e+00> : vector<16x128xf32>
    %30 = tpu.matmul %28, %29, %cst_16 {dimension_numbers = #tpu.dot_dimension_numbers<[1], [0], [0], [1], [0, 0, 1, 1], [], []>} : vector<16x128xbf16>, vector<128x128xbf16>, vector<16x128xf32> -> vector<16x128xf32>
    %c0_17 = arith.constant 0 : index
    %c0_18 = arith.constant 0 : index
    %31 = vector.load %arg6[%c0_17, %c0_18] : memref<1x128xf32, #tpu.memory_space<vmem>>, vector<1x128xf32>
    %32 = vector.broadcast %31 : vector<1x128xf32> to vector<16x128xf32>
    %33 = arith.addf %30, %32 : vector<16x128xf32>
    %34 = arith.truncf %33 : vector<16x128xf32> to vector<16x128xbf16>
    %c0_19 = arith.constant 0 : index
    %c0_20 = arith.constant 0 : index
    %35 = vector.load %arg8[%c0_19, %c0_20] : memref<16x128xbf16, #tpu.memory_space<vmem>>, vector<16x128xbf16>
    tpu.vector_store %arg8[%c0_19, %c0_20], %34 {strides = array<i32>} : memref<16x128xbf16, #tpu.memory_space<vmem>>, vector<16x128xbf16>,
    return
  }
  func.func @transform_0(%arg0: i32) -> (i32, i32) {
    %c0_i32 = arith.constant 0 : i32
    %c0_i32_0 = arith.constant 0 : i32
    return %arg0, %c0_i32 : i32, i32
  }
  func.func @transform_1(%arg0: i32) -> (i32, i32) {
    %c0_i32 = arith.constant 0 : i32
    %c0_i32_0 = arith.constant 0 : i32
    return %arg0, %c0_i32 : i32, i32
  }
  func.func @transform_2(%arg0: i32) -> (i32, i32) {
    %c0_i32 = arith.constant 0 : i32
    %c0_i32_0 = arith.constant 0 : i32
    %c0_i32_1 = arith.constant 0 : i32
    return %c0_i32, %c0_i32_0 : i32, i32
  }
  func.func @transform_3(%arg0: i32) -> (i32, i32) {
    %c0_i32 = arith.constant 0 : i32
    %c0_i32_0 = arith.constant 0 : i32
    %c0_i32_1 = arith.constant 0 : i32
    return %c0_i32, %c0_i32_0 : i32, i32
  }
  func.func @transform_4(%arg0: i32) -> (i32, i32) {
    %c0_i32 = arith.constant 0 : i32
    %c0_i32_0 = arith.constant 0 : i32
    %c0_i32_1 = arith.constant 0 : i32
    return %c0_i32, %c0_i32_0 : i32, i32
  }
  func.func @transform_5(%arg0: i32) -> (i32, i32) {
    %c0_i32 = arith.constant 0 : i32
    %c0_i32_0 = arith.constant 0 : i32
    %c0_i32_1 = arith.constant 0 : i32
    return %c0_i32, %c0_i32_0 : i32, i32
  }
  func.func @transform_6(%arg0: i32) -> (i32, i32) {
    %c0_i32 = arith.constant 0 : i32
    %c0_i32_0 = arith.constant 0 : i32
    %c0_i32_1 = arith.constant 0 : i32
    return %c0_i32, %c0_i32_0 : i32, i32
  }
  func.func @transform_7(%arg0: i32) -> (i32, i32) {
    %c0_i32 = arith.constant 0 : i32
    %c0_i32_0 = arith.constant 0 : i32
    return %arg0, %c0_i32 : i32, i32
  }
}

</mosaic_0001>

<llo_original>
// kernel: tpu_custom_call.1
$region0: #{tpu_custom_call.1}
  #allocation0 [shape = 'u32[]', space=smem, size = 0x4, offset = 0x4, fixed_abs, tag = 'smem constant byte address 0x4 - core index']
  #allocation1 [shape = 'u32[144,128]{1,0:T(1,128)}', space=vmem, size = 0x12000, scoped, tag = 'internal scratch']
  %s0 = inlined_call_operand.hbm [shape: bf16[32,128], index: 0, kind: input, shape index: {}]
  %s1 = inlined_call_operand.hbm [shape: bf16[256,128], index: 1, kind: input, shape index: {}]
  %s2 = inlined_call_operand.hbm [shape: bf16[128,128], index: 2, kind: input, shape index: {}]
  %s3 = inlined_call_operand.hbm [shape: bf16[128,256], index: 3, kind: input, shape index: {}]
  %s4 = inlined_call_operand.hbm [shape: bf16[128,128], index: 4, kind: input, shape index: {}]
  %s5 = inlined_call_operand.vmem [shape: f32[1,128], index: 5, kind: input, shape index: {}]
  %s6 = inlined_call_operand.hbm [shape: bf16[128,128], index: 6, kind: input, shape index: {}]
  %s7 = inlined_call_operand.hbm [shape: bf16[32,128], index: 7, kind: output, shape index: {}]
  %s8 = sld [smem:[#allocation0]]
  $region85: #{tpu_custom_call.1} parent=0
    _
  %s10 = ssub.s32 1, %s8
  %s11 = scalar_select 0, %s10, %s8
  $region1: #{tpu_custom_call.1} parent=0
    #allocation2 [shape = 'u8[8192]{0}', space=vmem, size = 0x2000, scoped, tag = 'input window, operand 0']
    #allocation3 [shape = 's32[2]{0}', space=sflag, size = 0x8, scoped, tag = 'scoped memory for tpu_custom_call.1']
    #allocation4 [shape = 's32[2]{0}', space=sflag, size = 0x8, scoped, tag = 'scoped memory for tpu_custom_call.1']
    #allocation5 [shape = 'u8[65536]{0}', space=vmem, size = 0x10000, scoped, tag = 'input window, operand 1']
    #allocation6 [shape = 's32[2]{0}', space=sflag, size = 0x8, scoped, tag = 'scoped memory for tpu_custom_call.1']
    #allocation7 [shape = 'u8[32768]{0}', space=vmem, size = 0x8000, scoped, tag = 'input window, operand 2, single buffered']
    #allocation8 [shape = 'u8[65536]{0}', space=vmem, size = 0x10000, scoped, tag = 'input window, operand 3, single buffered']
    #allocation9 [shape = 's32[1]{0}', space=sflag, size = 0x4, scoped, tag = 'scoped memory for tpu_custom_call.1']
    #allocation10 [shape = 'u8[32768]{0}', space=vmem, size = 0x8000, scoped, tag = 'input window, operand 4, single buffered']
    #allocation11 [shape = 'u8[32768]{0}', space=vmem, size = 0x8000, scoped, tag = 'input window, operand 6, single buffered']
    #allocation12 [shape = 's32[1]{0}', space=sflag, size = 0x4, scoped, tag = 'scoped memory for tpu_custom_call.1']
    #allocation13 [shape = 'u8[8192]{0}', space=vmem, size = 0x2000, scoped, tag = 'output window, operand 0']
    %12 = vsyncpa [#allocation3], 0
    %s13 = scalar_lea.sflag [#allocation3], 1
    %14 = vsyncpa %s13, 0
    %15 = vsyncpa [#allocation6], 0
    %s16 = scalar_lea.sflag [#allocation6], 1
    %17 = vsyncpa %s16, 0
    %18 = vsyncpa [#allocation9], 0
    %19 = vsyncpa [#allocation12], 0
    %20 = vsyncpa [#allocation4], 0
    %s21 = scalar_lea.sflag [#allocation4], 1
    %22 = vsyncpa %s21, 0
    loop: start=0, step=1, limit=4
    $region2: #{tpu_custom_call.1} parent=1 // loop_pre_header
      _
    $region3: #{tpu_custom_call.1} parent=1 // loop_header
      %s24 = sphi 0, %s28
      %p25 = scmp.ge.s32.totalorder %s24, 4
      %s34 = sphi 0, %s36
      %s37 = sphi 0, %s34
      %s38 = sphi 0, %s37
      %s54 = sphi 0, %s38
      %s60 = sphi 0, %s62
      %s63 = sphi 0, %s60
      %s64 = sphi 0, %s63
      %s80 = sphi 0, %s64
      %s84 = sphi 0, %s84
      %s86 = sphi 0, %s84
      %s87 = sphi 0, %s86
      %s101 = sphi 0, %s87
      %s105 = sphi 0, %s105
      %s107 = sphi 0, %s105
      %s108 = sphi 0, %s107
      %s122 = sphi 0, %s108
      %s126 = sphi 0, %s126
      %s128 = sphi 0, %s126
      %s129 = sphi 0, %s128
      %s143 = sphi 0, %s129
      %s147 = sphi 0, %s147
      %s149 = sphi 0, %s147
      %s150 = sphi 0, %s149
      %s164 = sphi 0, %s150
      %s168 = sphi 0, %s168
      %s170 = sphi 0, %s168
      %s171 = sphi 0, %s170
      %s185 = sphi 0, %s171
      %s191 = sphi 0, %s193
      %s194 = sphi 0, %s191
      %s195 = sphi 0, %s194
      %s211 = sphi 0, %s195
    $region4: #{tpu_custom_call.1} parent=1 // loop_header_branch
      %27 = sbr.rel (%p25) target = $region8
    $region5: #{tpu_custom_call.1} parent=1 // loop_body
      %s29 = ssub.s32 %s24, 1
      %s30 = ssub.s32 %s24, 2
      %s31 = sadd.s32 %s24, 1
      %s32 = ssub.s32 %s24, %s31
      %p33 = scmp.eq.s32.totalorder %s32, 0
      %s35 = sadd.s32 %s34, 1
      %s36 = scalar_select %p33, %s34, %s35
      %p39 = pneg %p33
      %p40 = scmp.eq.s32.totalorder %s24, 1
      %p41 = por %p39, %p40
      %p42 = scmp.ne.s32.totalorder %s34, %s37
      %p43 = scmp.eq.s32.totalorder %s24, 0
      %p44 = por %p42, %p43
      %p45 = scmp.ne.s32.totalorder %s34, %s37
      %p46 = scmp.eq.s32.totalorder %s29, 1
      %p47 = por %p45, %p46
      %p48 = scmp.ne.s32.totalorder %s37, %s38
      %p49 = scmp.eq.s32.totalorder %s29, 0
      %p50 = por %p48, %p49
      %p51 = scmp.ne.s32.totalorder %s37, %s38
      %p52 = scmp.eq.s32.totalorder %s30, 1
      %p53 = por %p51, %p52
      %p55 = scmp.ne.s32.totalorder %s38, %s54
      %p56 = scmp.eq.s32.totalorder %s30, 0
      %p57 = por %p55, %p56
      %s58 = ssub.s32 %s24, %s31
      %p59 = scmp.eq.s32.totalorder %s58, 0
      %s61 = sadd.s32 %s60, 1
      %s62 = scalar_select %p59, %s60, %s61
      %p65 = pneg %p59
      %p66 = scmp.eq.s32.totalorder %s24, 1
      %p67 = por %p65, %p66
      %p68 = scmp.ne.s32.totalorder %s60, %s63
      %p69 = scmp.eq.s32.totalorder %s24, 0
      %p70 = por %p68, %p69
      %p71 = scmp.ne.s32.totalorder %s60, %s63
      %p72 = scmp.eq.s32.totalorder %s29, 1
      %p73 = por %p71, %p72
      %p74 = scmp.ne.s32.totalorder %s63, %s64
      %p75 = scmp.eq.s32.totalorder %s29, 0
      %p76 = por %p74, %p75
      %p77 = scmp.ne.s32.totalorder %s63, %s64
      %p78 = scmp.eq.s32.totalorder %s30, 1
      %p79 = por %p77, %p78
      %p81 = scmp.ne.s32.totalorder %s64, %s80
      %p82 = scmp.eq.s32.totalorder %s30, 0
      %p83 = por %p81, %p82
      %s85 = sadd.s32 %s84, 1
      %p88 = scmp.eq.s32.totalorder %s24, 1
      %p89 = scmp.ne.s32.totalorder %s84, %s86
      %p90 = scmp.eq.s32.totalorder %s24, 0
      %p91 = por %p89, %p90
      %p92 = scmp.ne.s32.totalorder %s84, %s86
      %p93 = scmp.eq.s32.totalorder %s29, 1
      %p94 = por %p92, %p93
      %p95 = scmp.ne.s32.totalorder %s86, %s87
      %p96 = scmp.eq.s32.totalorder %s29, 0
      %p97 = por %p95, %p96
      %p98 = scmp.ne.s32.totalorder %s86, %s87
      %p99 = scmp.eq.s32.totalorder %s30, 1
      %p100 = por %p98, %p99
      %p102 = scmp.ne.s32.totalorder %s87, %s101
      %p103 = scmp.eq.s32.totalorder %s30, 0
      %p104 = por %p102, %p103
      %s106 = sadd.s32 %s105, 1
      %p109 = scmp.eq.s32.totalorder %s24, 1
      %p110 = scmp.ne.s32.totalorder %s105, %s107
      %p111 = scmp.eq.s32.totalorder %s24, 0
      %p112 = por %p110, %p111
      %p113 = scmp.ne.s32.totalorder %s105, %s107
      %p114 = scmp.eq.s32.totalorder %s29, 1
      %p115 = por %p113, %p114
      %p116 = scmp.ne.s32.totalorder %s107, %s108
      %p117 = scmp.eq.s32.totalorder %s29, 0
      %p118 = por %p116, %p117
      %p119 = scmp.ne.s32.totalorder %s107, %s108
      %p120 = scmp.eq.s32.totalorder %s30, 1
      %p121 = por %p119, %p120
      %p123 = scmp.ne.s32.totalorder %s108, %s122
      %p124 = scmp.eq.s32.totalorder %s30, 0
      %p125 = por %p123, %p124
      %s127 = sadd.s32 %s126, 1
      %p130 = scmp.eq.s32.totalorder %s24, 1
      %p131 = scmp.ne.s32.totalorder %s126, %s128
      %p132 = scmp.eq.s32.totalorder %s24, 0
      %p133 = por %p131, %p132
      %p134 = scmp.ne.s32.totalorder %s126, %s128
      %p135 = scmp.eq.s32.totalorder %s29, 1
      %p136 = por %p134, %p135
      %p137 = scmp.ne.s32.totalorder %s128, %s129
      %p138 = scmp.eq.s32.totalorder %s29, 0
      %p139 = por %p137, %p138
      %p140 = scmp.ne.s32.totalorder %s128, %s129
      %p141 = scmp.eq.s32.totalorder %s30, 1
      %p142 = por %p140, %p141
      %p144 = scmp.ne.s32.totalorder %s129, %s143
      %p145 = scmp.eq.s32.totalorder %s30, 0
      %p146 = por %p144, %p145
      %s148 = sadd.s32 %s147, 1
      %p151 = scmp.eq.s32.totalorder %s24, 1
      %p152 = scmp.ne.s32.totalorder %s147, %s149
      %p153 = scmp.eq.s32.totalorder %s24, 0
      %p154 = por %p152, %p153
      %p155 = scmp.ne.s32.totalorder %s147, %s149
      %p156 = scmp.eq.s32.totalorder %s29, 1
      %p157 = por %p155, %p156
      %p158 = scmp.ne.s32.totalorder %s149, %s150
      %p159 = scmp.eq.s32.totalorder %s29, 0
      %p160 = por %p158, %p159
      %p161 = scmp.ne.s32.totalorder %s149, %s150
      %p162 = scmp.eq.s32.totalorder %s30, 1
      %p163 = por %p161, %p162
      %p165 = scmp.ne.s32.totalorder %s150, %s164
      %p166 = scmp.eq.s32.totalorder %s30, 0
      %p167 = por %p165, %p166
      %s169 = sadd.s32 %s168, 1
      %p172 = scmp.eq.s32.totalorder %s24, 1
      %p173 = scmp.ne.s32.totalorder %s168, %s170
      %p174 = scmp.eq.s32.totalorder %s24, 0
      %p175 = por %p173, %p174
      %p176 = scmp.ne.s32.totalorder %s168, %s170
      %p177 = scmp.eq.s32.totalorder %s29, 1
      %p178 = por %p176, %p177
      %p179 = scmp.ne.s32.totalorder %s170, %s171
      %p180 = scmp.eq.s32.totalorder %s29, 0
      %p181 = por %p179, %p180
      %p182 = scmp.ne.s32.totalorder %s170, %s171
      %p183 = scmp.eq.s32.totalorder %s30, 1
      %p184 = por %p182, %p183
      %p186 = scmp.ne.s32.totalorder %s171, %s185
      %p187 = scmp.eq.s32.totalorder %s30, 0
      %p188 = por %p186, %p187
      %s189 = ssub.s32 %s24, %s31
      %p190 = scmp.eq.s32.totalorder %s189, 0
      %s192 = sadd.s32 %s191, 1
      %s193 = scalar_select %p190, %s191, %s192
      %p196 = pneg %p190
      %p197 = scmp.eq.s32.totalorder %s24, 1
      %p198 = por %p196, %p197
      %p199 = scmp.ne.s32.totalorder %s191, %s194
      %p200 = scmp.eq.s32.totalorder %s24, 0
      %p201 = por %p199, %p200
      %p202 = scmp.ne.s32.totalorder %s191, %s194
      %p203 = scmp.eq.s32.totalorder %s29, 1
      %p204 = por %p202, %p203
      %p205 = scmp.ne.s32.totalorder %s194, %s195
      %p206 = scmp.eq.s32.totalorder %s29, 0
      %p207 = por %p205, %p206
      %p208 = scmp.ne.s32.totalorder %s194, %s195
      %p209 = scmp.eq.s32.totalorder %s30, 1
      %p210 = por %p208, %p209
      %p212 = scmp.ne.s32.totalorder %s195, %s211
      %p213 = scmp.eq.s32.totalorder %s30, 0
      %p214 = por %p212, %p213
      %p215 = scmp.le.s32.totalorder 1, %s24
      %p216 = scmp.lt.s32.totalorder %s24, 3
      %p217 = pnand %p215, %p216
      %p218 = pneg %p217
      // Predicated region
      $region9: #{tpu_custom_call.1} parent=5 // pred_check
        _
      $region10: #{tpu_custom_call.1} parent=5 // pred_check_branch
        %220 = sbr.rel (%p217) target = $region12
      $region11: #{tpu_custom_call.1} parent=5 // pred_region
        %s221 = ssub.s32 %s24, 1
        // Predicated region
        $region13: #{tpu_custom_call.1} parent=11 // pred_check
          %p222 = pneg %p97
        $region14: #{tpu_custom_call.1} parent=11 // pred_check_branch
          %224 = sbr.rel (%p222) target = $region16
        $region15: #{tpu_custom_call.1} parent=11 // pred_region
          %s226 = ssub.s32 1024, 1024
          %227 = vsyncadd [#allocation6], %s226
          %s228 = sshll.u32 [#allocation7], 4
          %s229 = int_to_ptr.vmem [resolvable:$true] %s228
          %234 = dma.hbm_to_vmem [thread:$0]  %s2, 1024, %s229, [#allocation6], 64, 64, 4
        $region16: #{tpu_custom_call.1} parent=11 // pred_fallthru
          _
        // Predicated region
        $region17: #{tpu_custom_call.1} parent=11 // pred_check
          %p235 = pneg %p118
        $region18: #{tpu_custom_call.1} parent=11 // pred_check_branch
          %237 = sbr.rel (%p235) target = $region20
        $region19: #{tpu_custom_call.1} parent=11 // pred_region
          %s239 = ssub.s32 2048, 2048
          %240 = vsyncadd [#allocation9], %s239
          %s241 = sshll.u32 [#allocation8], 4
          %s242 = int_to_ptr.vmem [resolvable:$true] %s241
          %247 = dma.hbm_to_vmem [thread:$0]  %s3, 2048, %s242, [#allocation9], 128, 128, 8
        $region20: #{tpu_custom_call.1} parent=11 // pred_fallthru
          _
        // Predicated region
        $region21: #{tpu_custom_call.1} parent=11 // pred_check
          %p248 = pneg %p139
        $region22: #{tpu_custom_call.1} parent=11 // pred_check_branch
          %250 = sbr.rel (%p248) target = $region24
        $region23: #{tpu_custom_call.1} parent=11 // pred_region
          %s252 = ssub.s32 1024, 1024
          %253 = vsyncadd [#allocation9], %s252
          %s254 = sshll.u32 [#allocation10], 4
          %s255 = int_to_ptr.vmem [resolvable:$true] %s254
          %260 = dma.hbm_to_vmem [thread:$0]  %s4, 1024, %s255, [#allocation9], 64, 64, 4
        $region24: #{tpu_custom_call.1} parent=11 // pred_fallthru
          _
        // Predicated region
        $region25: #{tpu_custom_call.1} parent=11 // pred_check
          %p261 = pneg %p160
        $region26: #{tpu_custom_call.1} parent=11 // pred_check_branch
          %263 = sbr.rel (%p261) target = $region28
        $region27: #{tpu_custom_call.1} parent=11 // pred_region
          _
        $region28: #{tpu_custom_call.1} parent=11 // pred_fallthru
          _
        // Predicated region
        $region29: #{tpu_custom_call.1} parent=11 // pred_check
          %p264 = pneg %p181
        $region30: #{tpu_custom_call.1} parent=11 // pred_check_branch
          %266 = sbr.rel (%p264) target = $region32
        $region31: #{tpu_custom_call.1} parent=11 // pred_region
          %s268 = ssub.s32 1024, 1024
          %269 = vsyncadd [#allocation12], %s268
          %s270 = sshll.u32 [#allocation11], 4
          %s271 = int_to_ptr.vmem [resolvable:$true] %s270
          %276 = dma.hbm_to_vmem [thread:$0]  %s6, 1024, %s271, [#allocation12], 64, 64, 4
        $region32: #{tpu_custom_call.1} parent=11 // pred_fallthru
          _
      $region12: #{tpu_custom_call.1} parent=5 // pred_fallthru
        _
      %p277 = scmp.lt.s32.totalorder %s24, 2
      // Predicated region
      $region33: #{tpu_custom_call.1} parent=5 // pred_check
        %p278 = pneg %p277
      $region34: #{tpu_custom_call.1} parent=5 // pred_check_branch
        %280 = sbr.rel (%p278) target = $region36
      $region35: #{tpu_custom_call.1} parent=5 // pred_region
        // Predicated region
        $region37: #{tpu_custom_call.1} parent=35 // pred_check
          %p281 = pneg %p44
        $region38: #{tpu_custom_call.1} parent=35 // pred_check_branch
          %283 = sbr.rel (%p281) target = $region40
        $region39: #{tpu_custom_call.1} parent=35 // pred_region
          %s284 = sand.u32 %s34, 1
          %s285 = scalar_lea.sflag [#allocation3], %s284
          %s286 = sand.u32 %s34, 1
          %s287 = smul.addr %s286, 8
          %s288 = scalar_lea.vmem [#allocation2], %s287
          %s289 = smul.u32 2, %s24
          %s291 = ssub.s32 128, 128
          %292 = vsyncadd %s285, %s291
          %s293 = smul.addr %s289, 64
          %s294 = scalar_lea.hbm %s0, %s293
          %s295 = sshll.u32 %s288, 4
          %s296 = int_to_ptr.vmem [resolvable:$true] %s295
          %301 = dma.hbm_to_vmem [thread:$0]  %s294, 128, %s296, %s285, 64, 64, 4
        $region40: #{tpu_custom_call.1} parent=35 // pred_fallthru
          _
        // Predicated region
        $region41: #{tpu_custom_call.1} parent=35 // pred_check
          %p302 = pneg %p70
        $region42: #{tpu_custom_call.1} parent=35 // pred_check_branch
          %304 = sbr.rel (%p302) target = $region44
        $region43: #{tpu_custom_call.1} parent=35 // pred_region
          %s305 = sand.u32 %s24, 1
          %s306 = scalar_lea.sflag [#allocation6], %s305
          %s307 = sand.u32 %s60, 1
          %s308 = smul.addr %s307, 64
          %s309 = scalar_lea.vmem [#allocation5], %s308
          %s310 = smul.u32 16, %s24
          %s312 = ssub.s32 1024, 1024
          %313 = vsyncadd %s306, %s312
          %s314 = smul.addr %s310, 64
          %s315 = scalar_lea.hbm %s1, %s314
          %s316 = sshll.u32 %s309, 4
          %s317 = int_to_ptr.vmem [resolvable:$true] %s316
          %322 = dma.hbm_to_vmem [thread:$0]  %s315, 1024, %s317, %s306, 64, 64, 4
        $region44: #{tpu_custom_call.1} parent=35 // pred_fallthru
          _
      $region36: #{tpu_custom_call.1} parent=5 // pred_fallthru
        _
      %p323 = scmp.le.s32.totalorder 1, %s24
      %p324 = scmp.lt.s32.totalorder %s24, 3
      %p325 = pnand %p323, %p324
      %p326 = pneg %p325
      // Predicated region
      $region45: #{tpu_custom_call.1} parent=5 // pred_check
        _
      $region46: #{tpu_custom_call.1} parent=5 // pred_check_branch
        %328 = sbr.rel (%p325) target = $region48
      $region47: #{tpu_custom_call.1} parent=5 // pred_region
        %s329 = ssub.s32 %s24, 1
        %s330 = sand.u32 %s37, 1
        %s331 = scalar_lea.sflag [#allocation3], %s330
        %s332 = sand.u32 %s37, 1
        %s333 = smul.addr %s332, 8
        %s334 = scalar_lea.vmem [#allocation2], %s333
        // Predicated region
        $region49: #{tpu_custom_call.1} parent=47 // pred_check
          %p335 = pneg %p50
        $region50: #{tpu_custom_call.1} parent=47 // pred_check_branch
          %337 = sbr.rel (%p335) target = $region52
        $region51: #{tpu_custom_call.1} parent=47 // pred_region
          %338 = dma.done %s331, 128
        $region52: #{tpu_custom_call.1} parent=47 // pred_fallthru
          _
        %s339 = sand.u32 %s29, 1
        %s340 = scalar_lea.sflag [#allocation6], %s339
        %s341 = sand.u32 %s63, 1
        %s342 = smul.addr %s341, 64
        %s343 = scalar_lea.vmem [#allocation5], %s342
        // Predicated region
        $region53: #{tpu_custom_call.1} parent=47 // pred_check
          %p344 = pneg %p76
        $region54: #{tpu_custom_call.1} parent=47 // pred_check_branch
          %346 = sbr.rel (%p344) target = $region56
        $region55: #{tpu_custom_call.1} parent=47 // pred_region
          %347 = dma.done %s340, 1024
        $region56: #{tpu_custom_call.1} parent=47 // pred_fallthru
          _
        // Predicated region
        $region57: #{tpu_custom_call.1} parent=47 // pred_check
          %p348 = pneg %p97
        $region58: #{tpu_custom_call.1} parent=47 // pred_check_branch
          %350 = sbr.rel (%p348) target = $region60
        $region59: #{tpu_custom_call.1} parent=47 // pred_region
          %351 = dma.done [#allocation6], 1024
        $region60: #{tpu_custom_call.1} parent=47 // pred_fallthru
          _
        // Predicated region
        $region61: #{tpu_custom_call.1} parent=47 // pred_check
          %p352 = pneg %p118
        $region62: #{tpu_custom_call.1} parent=47 // pred_check_branch
          %354 = sbr.rel (%p352) target = $region64
        $region63: #{tpu_custom_call.1} parent=47 // pred_region
          %355 = dma.done [#allocation9], 2048
        $region64: #{tpu_custom_call.1} parent=47 // pred_fallthru
          _
        // Predicated region
        $region65: #{tpu_custom_call.1} parent=47 // pred_check
          %p356 = pneg %p139
        $region66: #{tpu_custom_call.1} parent=47 // pred_check_branch
          %358 = sbr.rel (%p356) target = $region68
        $region67: #{tpu_custom_call.1} parent=47 // pred_region
          %359 = dma.done [#allocation9], 1024
        $region68: #{tpu_custom_call.1} parent=47 // pred_fallthru
          _
        // Predicated region
        $region69: #{tpu_custom_call.1} parent=47 // pred_check
          %p360 = pneg %p181
        $region70: #{tpu_custom_call.1} parent=47 // pred_check_branch
          %362 = sbr.rel (%p360) target = $region72
        $region71: #{tpu_custom_call.1} parent=47 // pred_region
          %363 = dma.done [#allocation12], 1024
        $region72: #{tpu_custom_call.1} parent=47 // pred_fallthru
          _
        %s364 = sand.u32 %s37, 1
        %s365 = scalar_lea.sflag [#allocation3], %s364
        %s366 = sand.u32 %s37, 1
        %s367 = smul.addr %s366, 8
        %s368 = scalar_lea.vmem [#allocation2], %s367
        %p369 = pneg %p50
        %p370 = pneg %p47
        %s371 = sand.u32 %s29, 1
        %s372 = scalar_lea.sflag [#allocation6], %s371
        %s373 = sand.u32 %s63, 1
        %s374 = smul.addr %s373, 64
        %s375 = scalar_lea.vmem [#allocation5], %s374
        %p376 = pneg %p76
        %p377 = pneg %p73
        %p378 = pneg %p97
        %p379 = pneg %p94
        %p380 = pneg %p118
        %p381 = pneg %p115
        %p382 = pneg %p139
        %p383 = pneg %p136
        %p384 = pneg %p160
        %p385 = pneg %p157
        %p386 = pneg %p181
        %p387 = pneg %p178
        %p388 = pneg %p207
        %p389 = pneg %p204
        %s390 = sand.u32 %s194, 1
        %s391 = scalar_lea.sflag [#allocation4], %s390
        %s392 = sand.u32 %s194, 1
        %s393 = smul.addr %s392, 8
        %s394 = scalar_lea.vmem [#allocation13], %s393
        %s395 = smul.u32 2, %s29
        %s396 = smul.u32 16, %s29
        %s397 = smul.u32 2, %s29
        %v399 = vld [vmem:[%s334] sm:$0xf]
        %v400 = vld [vmem:[%s334 + $0x4] sm:$0xf]
        %v401 = vld [vmem:[%s343] sm:$0xf]
        %v402 = vld [vmem:[%s343 + $0x4] sm:$0xf]
        %v403 = vld [vmem:[%s343 + $0x8] sm:$0xf]
        %v404 = vld [vmem:[%s343 + $0xc] sm:$0xf]
        %v405 = vld [vmem:[%s343 + $0x10] sm:$0xf]
        %v406 = vld [vmem:[%s343 + $0x14] sm:$0xf]
        %v407 = vld [vmem:[%s343 + $0x18] sm:$0xf]
        %v408 = vld [vmem:[%s343 + $0x1c] sm:$0xf]
        %v409 = vld [vmem:[%s343 + $0x20] sm:$0xf]
        %v410 = vld [vmem:[%s343 + $0x24] sm:$0xf]
        %v411 = vld [vmem:[%s343 + $0x28] sm:$0xf]
        %v412 = vld [vmem:[%s343 + $0x2c] sm:$0xf]
        %v413 = vld [vmem:[%s343 + $0x30] sm:$0xf]
        %v414 = vld [vmem:[%s343 + $0x34] sm:$0xf]
        %v415 = vld [vmem:[%s343 + $0x38] sm:$0xf]
        %v416 = vld [vmem:[%s343 + $0x3c] sm:$0xf]
        %v417 = vld [vmem:[#allocation7] sm:$0xf]
        %v418 = vld [vmem:[#allocation7 + $0x4] sm:$0xf]
        %v419 = vld [vmem:[#allocation7 + $0x8] sm:$0xf]
        %v420 = vld [vmem:[#allocation7 + $0xc] sm:$0xf]
        %v421 = vld [vmem:[#allocation7 + $0x10] sm:$0xf]
        %v422 = vld [vmem:[#allocation7 + $0x14] sm:$0xf]
        %v423 = vld [vmem:[#allocation7 + $0x18] sm:$0xf]
        %v424 = vld [vmem:[#allocation7 + $0x1c] sm:$0xf]
        %v425 = vld [vmem:[#allocation7 + $0x20] sm:$0xf]
        %v426 = vld [vmem:[#allocation7 + $0x24] sm:$0xf]
        %v427 = vld [vmem:[#allocation7 + $0x28] sm:$0xf]
        %v428 = vld [vmem:[#allocation7 + $0x2c] sm:$0xf]
        %v429 = vld [vmem:[#allocation7 + $0x30] sm:$0xf]
        %v430 = vld [vmem:[#allocation7 + $0x34] sm:$0xf]
        %v431 = vld [vmem:[#allocation7 + $0x38] sm:$0xf]
        %v432 = vld [vmem:[#allocation7 + $0x3c] sm:$0xf]
        %v435 = vunpack.c.l.b16 %v399
        %v436 = vunpack.c.l.b16 %v400
        %v437 = vpack.c.b16 %v436, %v435
        %v455 = vunpack.c.l.b16 %v417
        %v456 = vunpack.c.l.b16 %v418
        %v457 = vunpack.c.l.b16 %v419
        %v458 = vunpack.c.l.b16 %v420
        %v459 = vunpack.c.l.b16 %v421
        %v460 = vunpack.c.l.b16 %v422
        %v461 = vunpack.c.l.b16 %v423
        %v462 = vunpack.c.l.b16 %v424
        %v463 = vunpack.c.l.b16 %v425
        %v464 = vunpack.c.l.b16 %v426
        %v465 = vunpack.c.l.b16 %v427
        %v466 = vunpack.c.l.b16 %v428
        %v467 = vunpack.c.l.b16 %v429
        %v468 = vunpack.c.l.b16 %v430
        %v469 = vunpack.c.l.b16 %v431
        %v470 = vunpack.c.l.b16 %v432
        %v471 = vpack.c.b16 %v456, %v455
        %v472 = vpack.c.b16 %v458, %v457
        %v473 = vpack.c.b16 %v460, %v459
        %v474 = vpack.c.b16 %v462, %v461
        %v475 = vpack.c.b16 %v464, %v463
        %v476 = vpack.c.b16 %v466, %v465
        %v477 = vpack.c.b16 %v468, %v467
        %v478 = vpack.c.b16 %v470, %v469
        %487 = vmatprep.subr.bf16.mxu0 0
        %488 = vmatpush1.bf16.msra.mxu0 %v471
        %489 = vmatprep.subr.bf16.mxu0 0
        %490 = vmatpush1.bf16.msra.mxu0 %v472
        %491 = vmatprep.subr.bf16.mxu0 0
        %492 = vmatpush1.bf16.msra.mxu0 %v473
        %493 = vmatprep.subr.bf16.mxu0 0
        %494 = vmatpush1.bf16.msra.mxu0 %v474
        %495 = vmatprep.subr.bf16.mxu0 0
        %496 = vmatpush1.bf16.msra.mxu0 %v475
        %497 = vmatprep.subr.bf16.mxu0 0
        %498 = vmatpush1.bf16.msra.mxu0 %v476
        %499 = vmatprep.subr.bf16.mxu0 0
        %500 = vmatpush1.bf16.msra.mxu0 %v477
        %501 = vmatprep.subr.bf16.mxu0 0
        %502 = vmatpush1.bf16.msra.mxu0 %v478
        %503 = vmatprep.subr.bf16.mxu0 0
        %504 = vmatpush1.bf16.msra.mxu0 0
        %505 = vmatprep.subr.bf16.mxu0 0
        %506 = vmatpush1.bf16.msra.mxu0 0
        %507 = vmatprep.subr.bf16.mxu0 0
        %508 = vmatpush1.bf16.msra.mxu0 0
        %509 = vmatprep.subr.bf16.mxu0 0
        %510 = vmatpush1.bf16.msra.mxu0 0
        %511 = vmatprep.subr.bf16.mxu0 0
        %512 = vmatpush1.bf16.msra.mxu0 0
        %513 = vmatprep.subr.bf16.mxu0 0
        %514 = vmatpush1.bf16.msra.mxu0 0
        %515 = vmatprep.subr.bf16.mxu0 0
        %516 = vmatpush1.bf16.msra.mxu0 0
        %517 = vmatprep.subr.bf16.mxu0 0
        %518 = vmatpush1.bf16.msra.mxu0 0
        %519 = vmatprep.mubr.bf16.mxu0 0
        %520 = vmatmul.mubr.bf16.gmra.mrb[0].mxu0 %v437
        %v521 = vpop.f32.mrb[0].mxu0
        %v522 = vadd.f32 0.0, %v521
        %v523 = vpop.f32.mrb[0].mxu0
        %v524 = vpop.f32.mrb[0].mxu0
        %v525 = vadd.f32 0.0, %v524
        %v526 = vpop.f32.mrb[0].mxu0
        %527 = vdwg.mxu0
        %v528 = vld [vmem:[#allocation8] sm:$0xff]
        %v529 = vld [vmem:[#allocation8 + $0x8] sm:$0xff]
        %v530 = vld [vmem:[#allocation8 + $0x10] sm:$0xff]
        %v531 = vld [vmem:[#allocation8 + $0x18] sm:$0xff]
        %v532 = vld [vmem:[#allocation8 + $0x20] sm:$0xff]
        %v533 = vld [vmem:[#allocation8 + $0x28] sm:$0xff]
        %v534 = vld [vmem:[#allocation8 + $0x30] sm:$0xff]
        %v535 = vld [vmem:[#allocation8 + $0x38] sm:$0xff]
        %v536 = vld [vmem:[#allocation8 + $0x40] sm:$0xff]
        %v537 = vld [vmem:[#allocation8 + $0x48] sm:$0xff]
        %v538 = vld [vmem:[#allocation8 + $0x50] sm:$0xff]
        %v539 = vld [vmem:[#allocation8 + $0x58] sm:$0xff]
        %v540 = vld [vmem:[#allocation8 + $0x60] sm:$0xff]
        %v541 = vld [vmem:[#allocation8 + $0x68] sm:$0xff]
        %v542 = vld [vmem:[#allocation8 + $0x70] sm:$0xff]
        %v543 = vld [vmem:[#allocation8 + $0x78] sm:$0xff]
        %v560 = vunpack.c.l.b16 %v401
        %v561 = vunpack.c.l.b16 %v402
        %v562 = vunpack.c.l.b16 %v403
        %v563 = vunpack.c.l.b16 %v404
        %v564 = vunpack.c.l.b16 %v405
        %v565 = vunpack.c.l.b16 %v406
        %v566 = vunpack.c.l.b16 %v407
        %v567 = vunpack.c.l.b16 %v408
        %v568 = vunpack.c.l.b16 %v409
        %v569 = vunpack.c.l.b16 %v410
        %v570 = vunpack.c.l.b16 %v411
        %v571 = vunpack.c.l.b16 %v412
        %v572 = vunpack.c.l.b16 %v413
        %v573 = vunpack.c.l.b16 %v414
        %v574 = vunpack.c.l.b16 %v415
        %v575 = vunpack.c.l.b16 %v416
        %v576 = vpack.c.b16 %v561, %v560
        %v577 = vpack.c.b16 %v563, %v562
        %v578 = vpack.c.b16 %v565, %v564
        %v579 = vpack.c.b16 %v567, %v566
        %v580 = vpack.c.b16 %v569, %v568
        %v581 = vpack.c.b16 %v571, %v570
        %v582 = vpack.c.b16 %v573, %v572
        %v583 = vpack.c.b16 %v575, %v574
        %v608 = vunpack.c.l.b16 %v528
        %v609 = vunpack.c.h.b16 %v528
        %v610 = vunpack.c.l.b16 %v529
        %v611 = vunpack.c.h.b16 %v529
        %v612 = vunpack.c.l.b16 %v530
        %v613 = vunpack.c.h.b16 %v530
        %v614 = vunpack.c.l.b16 %v531
        %v615 = vunpack.c.h.b16 %v531
        %v616 = vunpack.c.l.b16 %v532
        %v617 = vunpack.c.h.b16 %v532
        %v618 = vunpack.c.l.b16 %v533
        %v619 = vunpack.c.h.b16 %v533
        %v620 = vunpack.c.l.b16 %v534
        %v621 = vunpack.c.h.b16 %v534
        %v622 = vunpack.c.l.b16 %v535
        %v623 = vunpack.c.h.b16 %v535
        %v624 = vunpack.c.l.b16 %v536
        %v625 = vunpack.c.h.b16 %v536
        %v626 = vunpack.c.l.b16 %v537
        %v627 = vunpack.c.h.b16 %v537
        %v628 = vunpack.c.l.b16 %v538
        %v629 = vunpack.c.h.b16 %v538
        %v630 = vunpack.c.l.b16 %v539
        %v631 = vunpack.c.h.b16 %v539
        %v632 = vunpack.c.l.b16 %v540
        %v633 = vunpack.c.h.b16 %v540
        %v634 = vunpack.c.l.b16 %v541
        %v635 = vunpack.c.h.b16 %v541
        %v636 = vunpack.c.l.b16 %v542
        %v637 = vunpack.c.h.b16 %v542
        %v638 = vunpack.c.l.b16 %v543
        %v639 = vunpack.c.h.b16 %v543
        %v640 = vpack.c.b16 %v610, %v608
        %v641 = vpack.c.b16 %v611, %v609
        %v642 = vpack.c.b16 %v614, %v612
        %v643 = vpack.c.b16 %v615, %v613
        %v644 = vpack.c.b16 %v618, %v616
        %v645 = vpack.c.b16 %v619, %v617
        %v646 = vpack.c.b16 %v622, %v620
        %v647 = vpack.c.b16 %v623, %v621
        %v648 = vpack.c.b16 %v626, %v624
        %v649 = vpack.c.b16 %v627, %v625
        %v650 = vpack.c.b16 %v630, %v628
        %v651 = vpack.c.b16 %v631, %v629
        %v652 = vpack.c.b16 %v634, %v632
        %v653 = vpack.c.b16 %v635, %v633
        %v654 = vpack.c.b16 %v638, %v636
        %v655 = vpack.c.b16 %v639, %v637
        %672 = vmatprep.subr.bf16.mxu0 %v641
        %673 = vmatpush1.bf16.msra.mxu0 %v640
        %674 = vmatprep.subr.bf16.mxu0 %v643
        %675 = vmatpush1.bf16.msra.mxu0 %v642
        %676 = vmatprep.subr.bf16.mxu0 %v645
        %677 = vmatpush1.bf16.msra.mxu0 %v644
        %678 = vmatprep.subr.bf16.mxu0 %v647
        %679 = vmatpush1.bf16.msra.mxu0 %v646
        %680 = vmatprep.subr.bf16.mxu0 %v649
        %681 = vmatpush1.bf16.msra.mxu0 %v648
        %682 = vmatprep.subr.bf16.mxu0 %v651
        %683 = vmatpush1.bf16.msra.mxu0 %v650
        %684 = vmatprep.subr.bf16.mxu0 %v653
        %685 = vmatpush1.bf16.msra.mxu0 %v652
        %686 = vmatprep.subr.bf16.mxu0 %v655
        %687 = vmatpush1.bf16.msra.mxu0 %v654
        %688 = vmatprep.subr.bf16.mxu0 0
        %689 = vmatpush1.bf16.msra.mxu0 0
        %690 = vmatprep.subr.bf16.mxu0 0
        %691 = vmatpush1.bf16.msra.mxu0 0
        %692 = vmatprep.subr.bf16.mxu0 0
        %693 = vmatpush1.bf16.msra.mxu0 0
        %694 = vmatprep.subr.bf16.mxu0 0
        %695 = vmatpush1.bf16.msra.mxu0 0
        %696 = vmatprep.subr.bf16.mxu0 0
        %697 = vmatpush1.bf16.msra.mxu0 0
        %698 = vmatprep.subr.bf16.mxu0 0
        %699 = vmatpush1.bf16.msra.mxu0 0
        %700 = vmatprep.subr.bf16.mxu0 0
        %701 = vmatpush1.bf16.msra.mxu0 0
        %702 = vmatprep.subr.bf16.mxu0 0
        %703 = vmatpush1.bf16.msra.mxu0 0
        %704 = vmatprep.mubr.bf16.mxu0 0
        %705 = vmatmul.mubr.bf16.gmra.mrb[0].mxu0 %v576
        %v706 = vpop.f32.mrb[0].mxu0
        %v707 = vadd.f32 0.0, %v706
        %v708 = vpop.f32.mrb[0].mxu0
        %v709 = vadd.f32 0.0, %v708
        %v710 = vpop.f32.mrb[0].mxu0
        %v711 = vadd.f32 0.0, %v710
        %v712 = vpop.f32.mrb[0].mxu0
        %v713 = vadd.f32 0.0, %v712
        %714 = vmatprep.mubr.bf16.mxu0 0
        %715 = vmatmul.mubr.bf16.gmra.mrb[0].mxu0 %v577
        %v716 = vpop.f32.mrb[0].mxu0
        %v717 = vadd.f32 0.0, %v716
        %v718 = vpop.f32.mrb[0].mxu0
        %v719 = vadd.f32 0.0, %v718
        %v720 = vpop.f32.mrb[0].mxu0
        %v721 = vadd.f32 0.0, %v720
        %v722 = vpop.f32.mrb[0].mxu0
        %v723 = vadd.f32 0.0, %v722
        %724 = vmatprep.mubr.bf16.mxu0 0
        %725 = vmatmul.mubr.bf16.gmra.mrb[0].mxu0 %v578
        %v726 = vpop.f32.mrb[0].mxu0
        %v727 = vadd.f32 0.0, %v726
        %v728 = vpop.f32.mrb[0].mxu0
        %v729 = vadd.f32 0.0, %v728
        %v730 = vpop.f32.mrb[0].mxu0
        %v731 = vadd.f32 0.0, %v730
        %v732 = vpop.f32.mrb[0].mxu0
        %v733 = vadd.f32 0.0, %v732
        %734 = vmatprep.mubr.bf16.mxu0 0
        %735 = vmatmul.mubr.bf16.gmra.mrb[0].mxu0 %v579
        %v736 = vpop.f32.mrb[0].mxu0
        %v737 = vadd.f32 0.0, %v736
        %v738 = vpop.f32.mrb[0].mxu0
        %v739 = vadd.f32 0.0, %v738
        %v740 = vpop.f32.mrb[0].mxu0
        %v741 = vadd.f32 0.0, %v740
        %v742 = vpop.f32.mrb[0].mxu0
        %v743 = vadd.f32 0.0, %v742
        %744 = vmatprep.mubr.bf16.mxu0 0
        %745 = vmatmul.mubr.bf16.gmra.mrb[0].mxu0 %v580
        %v746 = vpop.f32.mrb[0].mxu0
        %v747 = vadd.f32 0.0, %v746
        %v748 = vpop.f32.mrb[0].mxu0
        %v749 = vadd.f32 0.0, %v748
        %v750 = vpop.f32.mrb[0].mxu0
        %v751 = vadd.f32 0.0, %v750
        %v752 = vpop.f32.mrb[0].mxu0
        %v753 = vadd.f32 0.0, %v752
        %754 = vmatprep.mubr.bf16.mxu0 0
        %755 = vmatmul.mubr.bf16.gmra.mrb[0].mxu0 %v581
        %v756 = vpop.f32.mrb[0].mxu0
        %v757 = vadd.f32 0.0, %v756
        %v758 = vpop.f32.mrb[0].mxu0
        %v759 = vadd.f32 0.0, %v758
        %v760 = vpop.f32.mrb[0].mxu0
        %v761 = vadd.f32 0.0, %v760
        %v762 = vpop.f32.mrb[0].mxu0
        %v763 = vadd.f32 0.0, %v762
        %764 = vmatprep.mubr.bf16.mxu0 0
        %765 = vmatmul.mubr.bf16.gmra.mrb[0].mxu0 %v582
        %v766 = vpop.f32.mrb[0].mxu0
        %v767 = vadd.f32 0.0, %v766
        %v768 = vpop.f32.mrb[0].mxu0
        %v769 = vadd.f32 0.0, %v768
        %v770 = vpop.f32.mrb[0].mxu0
        %v771 = vadd.f32 0.0, %v770
        %v772 = vpop.f32.mrb[0].mxu0
        %v773 = vadd.f32 0.0, %v772
        %774 = vmatprep.mubr.bf16.mxu0 0
        %775 = vmatmul.mubr.bf16.gmra.mrb[0].mxu0 %v583
        %v776 = vpop.f32.mrb[0].mxu0
        %v777 = vadd.f32 0.0, %v776
        %v778 = vpop.f32.mrb[0].mxu0
        %v779 = vadd.f32 0.0, %v778
        %v780 = vpop.f32.mrb[0].mxu0
        %v781 = vadd.f32 0.0, %v780
        %v782 = vpop.f32.mrb[0].mxu0
        %v783 = vadd.f32 0.0, %v782
        %784 = vdwg.mxu0
        %v787 = vcombine.high %v522, %v522
        %v789 = vunpack.c.l.s4 1966171168
        %v790 = vunpack.c.0.s8 %v789
        %v791 = vlaneseq
        %v792 = vshrl.u32 %v791, 7
        %v793 = vsub.s32 %v790, %v792
        %v794 = vrot.slane %v522, %v793
        %v796 = vunpack.c.l.s4 1966171168
        %v797 = vunpack.c.0.s8 %v796
        %v798 = vlaneseq
        %v799 = vshrl.u32 %v798, 7
        %v800 = vsub.s32 %v797, %v799
        %v801 = vrot.slane %v787, %v800
        %v802 = vcombine.high %v794, %v794
        %v803 = vcombine.high %v801, %v801
        %v805 = vunpack.c.l.s4 1966171168
        %v806 = vunpack.c.0.s8 %v805
        %v807 = vlaneseq
        %v808 = vshrl.u32 %v807, 7
        %v809 = vsub.s32 %v806, %v808
        %v810 = vrot.slane %v794, %v809
        %v812 = vunpack.c.l.s4 1966171168
        %v813 = vunpack.c.0.s8 %v812
        %v814 = vlaneseq
        %v815 = vshrl.u32 %v814, 7
        %v816 = vsub.s32 %v813, %v815
        %v817 = vrot.slane %v801, %v816
        %v819 = vunpack.c.l.s4 1966171168
        %v820 = vunpack.c.0.s8 %v819
        %v821 = vlaneseq
        %v822 = vshrl.u32 %v821, 7
        %v823 = vsub.s32 %v820, %v822
        %v824 = vrot.slane %v802, %v823
        %v826 = vunpack.c.l.s4 1966171168
        %v827 = vunpack.c.0.s8 %v826
        %v828 = vlaneseq
        %v829 = vshrl.u32 %v828, 7
        %v830 = vsub.s32 %v827, %v829
        %v831 = vrot.slane %v803, %v830
        %v832 = vcombine.high %v810, %v810
        %v833 = vcombine.high %v817, %v817
        %v834 = vcombine.high %v824, %v824
        %v835 = vcombine.high %v831, %v831
        %v836 = vcombine.high %v525, %v525
        %v838 = vunpack.c.l.s4 1966171168
        %v839 = vunpack.c.0.s8 %v838
        %v840 = vlaneseq
        %v841 = vshrl.u32 %v840, 7
        %v842 = vsub.s32 %v839, %v841
        %v843 = vrot.slane %v525, %v842
        %v845 = vunpack.c.l.s4 1966171168
        %v846 = vunpack.c.0.s8 %v845
        %v847 = vlaneseq
        %v848 = vshrl.u32 %v847, 7
        %v849 = vsub.s32 %v846, %v848
        %v850 = vrot.slane %v836, %v849
        %v851 = vcombine.high %v843, %v843
        %v852 = vcombine.high %v850, %v850
        %v854 = vunpack.c.l.s4 1966171168
        %v855 = vunpack.c.0.s8 %v854
        %v856 = vlaneseq
        %v857 = vshrl.u32 %v856, 7
        %v858 = vsub.s32 %v855, %v857
        %v859 = vrot.slane %v843, %v858
        %v861 = vunpack.c.l.s4 1966171168
        %v862 = vunpack.c.0.s8 %v861
        %v863 = vlaneseq
        %v864 = vshrl.u32 %v863, 7
        %v865 = vsub.s32 %v862, %v864
        %v866 = vrot.slane %v850, %v865
        %v868 = vunpack.c.l.s4 1966171168
        %v869 = vunpack.c.0.s8 %v868
        %v870 = vlaneseq
        %v871 = vshrl.u32 %v870, 7
        %v872 = vsub.s32 %v869, %v871
        %v873 = vrot.slane %v851, %v872
        %v875 = vunpack.c.l.s4 1966171168
        %v876 = vunpack.c.0.s8 %v875
        %v877 = vlaneseq
        %v878 = vshrl.u32 %v877, 7
        %v879 = vsub.s32 %v876, %v878
        %v880 = vrot.slane %v852, %v879
        %v881 = vcombine.high %v859, %v859
        %v882 = vcombine.high %v866, %v866
        %v883 = vcombine.high %v873, %v873
        %v884 = vcombine.high %v880, %v880
        %v885 = vlaneseq
        %v886 = vshrl.u32 %v885, 7
        %v887 = vsub.s32 0, %v886
        %v888 = vrot.slane %v810, %v887
        %v889 = vlaneseq
        %v890 = vshrl.u32 %v889, 7
        %v891 = vsub.s32 0, %v890
        %v892 = vrot.slane %v824, %v891
        %v893 = vlaneseq
        %v894 = vshrl.u32 %v893, 7
        %v895 = vsub.s32 0, %v894
        %v896 = vrot.slane %v832, %v895
        %v897 = vlaneseq
        %v898 = vshrl.u32 %v897, 7
        %v899 = vsub.s32 0, %v898
        %v900 = vrot.slane %v834, %v899
        %v901 = vlaneseq
        %v902 = vshrl.u32 %v901, 7
        %v903 = vsub.s32 0, %v902
        %v904 = vrot.slane %v817, %v903
        %v905 = vlaneseq
        %v906 = vshrl.u32 %v905, 7
        %v907 = vsub.s32 0, %v906
        %v908 = vrot.slane %v831, %v907
        %v909 = vlaneseq
        %v910 = vshrl.u32 %v909, 7
        %v911 = vsub.s32 0, %v910
        %v912 = vrot.slane %v833, %v911
        %v913 = vlaneseq
        %v914 = vshrl.u32 %v913, 7
        %v915 = vsub.s32 0, %v914
        %v916 = vrot.slane %v835, %v915
        %v917 = vlaneseq
        %v918 = vshrl.u32 %v917, 7
        %v919 = vsub.s32 0, %v918
        %v920 = vrot.slane %v859, %v919
        %v921 = vlaneseq
        %v922 = vshrl.u32 %v921, 7
        %v923 = vsub.s32 0, %v922
        %v924 = vrot.slane %v873, %v923
        %v925 = vlaneseq
        %v926 = vshrl.u32 %v925, 7
        %v927 = vsub.s32 0, %v926
        %v928 = vrot.slane %v881, %v927
        %v929 = vlaneseq
        %v930 = vshrl.u32 %v929, 7
        %v931 = vsub.s32 0, %v930
        %v932 = vrot.slane %v883, %v931
        %v933 = vlaneseq
        %v934 = vshrl.u32 %v933, 7
        %v935 = vsub.s32 0, %v934
        %v936 = vrot.slane %v866, %v935
        %v937 = vlaneseq
        %v938 = vshrl.u32 %v937, 7
        %v939 = vsub.s32 0, %v938
        %v940 = vrot.slane %v880, %v939
        %v941 = vlaneseq
        %v942 = vshrl.u32 %v941, 7
        %v943 = vsub.s32 0, %v942
        %v944 = vrot.slane %v882, %v943
        %v945 = vlaneseq
        %v946 = vshrl.u32 %v945, 7
        %v947 = vsub.s32 0, %v946
        %v948 = vrot.slane %v884, %v947
        %v965 = vmul.f32 %v707, %v888
        %v966 = vmul.f32 %v711, %v892
        %v967 = vmul.f32 %v717, %v896
        %v968 = vmul.f32 %v721, %v900
        %v969 = vmul.f32 %v727, %v904
        %v970 = vmul.f32 %v731, %v908
        %v971 = vmul.f32 %v737, %v912
        %v972 = vmul.f32 %v741, %v916
        %v973 = vmul.f32 %v747, %v920
        %v974 = vmul.f32 %v751, %v924
        %v975 = vmul.f32 %v757, %v928
        %v976 = vmul.f32 %v761, %v932
        %v977 = vmul.f32 %v767, %v936
        %v978 = vmul.f32 %v771, %v940
        %v979 = vmul.f32 %v777, %v944
        %v980 = vmul.f32 %v781, %v948
        %v981 = vpack.c.bf16 %v966, %v965
        %v982 = vpack.c.bf16 %v968, %v967
        %v983 = vpack.c.bf16 %v970, %v969
        %v984 = vpack.c.bf16 %v972, %v971
        %v985 = vpack.c.bf16 %v974, %v973
        %v986 = vpack.c.bf16 %v976, %v975
        %v987 = vpack.c.bf16 %v978, %v977
        %v988 = vpack.c.bf16 %v980, %v979
        %v989 = vld [vmem:[#allocation11] sm:$0xf]
        %v990 = vld [vmem:[#allocation11 + $0x4] sm:$0xf]
        %v991 = vld [vmem:[#allocation11 + $0x8] sm:$0xf]
        %v992 = vld [vmem:[#allocation11 + $0xc] sm:$0xf]
        %v993 = vld [vmem:[#allocation11 + $0x10] sm:$0xf]
        %v994 = vld [vmem:[#allocation11 + $0x14] sm:$0xf]
        %v995 = vld [vmem:[#allocation11 + $0x18] sm:$0xf]
        %v996 = vld [vmem:[#allocation11 + $0x1c] sm:$0xf]
        %v997 = vld [vmem:[#allocation11 + $0x20] sm:$0xf]
        %v998 = vld [vmem:[#allocation11 + $0x24] sm:$0xf]
        %v999 = vld [vmem:[#allocation11 + $0x28] sm:$0xf]
        %v1000 = vld [vmem:[#allocation11 + $0x2c] sm:$0xf]
        %v1001 = vld [vmem:[#allocation11 + $0x30] sm:$0xf]
        %v1002 = vld [vmem:[#allocation11 + $0x34] sm:$0xf]
        %v1003 = vld [vmem:[#allocation11 + $0x38] sm:$0xf]
        %v1004 = vld [vmem:[#allocation11 + $0x3c] sm:$0xf]
        %v1021 = vunpack.c.l.b16 %v989
        %v1022 = vunpack.c.l.b16 %v990
        %v1023 = vunpack.c.l.b16 %v991
        %v1024 = vunpack.c.l.b16 %v992
        %v1025 = vunpack.c.l.b16 %v993
        %v1026 = vunpack.c.l.b16 %v994
        %v1027 = vunpack.c.l.b16 %v995
        %v1028 = vunpack.c.l.b16 %v996
        %v1029 = vunpack.c.l.b16 %v997
        %v1030 = vunpack.c.l.b16 %v998
        %v1031 = vunpack.c.l.b16 %v999
        %v1032 = vunpack.c.l.b16 %v1000
        %v1033 = vunpack.c.l.b16 %v1001
        %v1034 = vunpack.c.l.b16 %v1002
        %v1035 = vunpack.c.l.b16 %v1003
        %v1036 = vunpack.c.l.b16 %v1004
        %v1037 = vpack.c.b16 %v1022, %v1021
        %v1038 = vpack.c.b16 %v1024, %v1023
        %v1039 = vpack.c.b16 %v1026, %v1025
        %v1040 = vpack.c.b16 %v1028, %v1027
        %v1041 = vpack.c.b16 %v1030, %v1029
        %v1042 = vpack.c.b16 %v1032, %v1031
        %v1043 = vpack.c.b16 %v1034, %v1033
        %v1044 = vpack.c.b16 %v1036, %v1035
        %1053 = vmatprep.subr.bf16.mxu0 0
        %1054 = vmatpush1.bf16.msra.mxu0 %v1037
        %1055 = vmatprep.subr.bf16.mxu0 0
        %1056 = vmatpush1.bf16.msra.mxu0 %v1038
        %1057 = vmatprep.subr.bf16.mxu0 0
        %1058 = vmatpush1.bf16.msra.mxu0 %v1039
        %1059 = vmatprep.subr.bf16.mxu0 0
        %1060 = vmatpush1.bf16.msra.mxu0 %v1040
        %1061 = vmatprep.subr.bf16.mxu0 0
        %1062 = vmatpush1.bf16.msra.mxu0 %v1041
        %1063 = vmatprep.subr.bf16.mxu0 0
        %1064 = vmatpush1.bf16.msra.mxu0 %v1042
        %1065 = vmatprep.subr.bf16.mxu0 0
        %1066 = vmatpush1.bf16.msra.mxu0 %v1043
        %1067 = vmatprep.subr.bf16.mxu0 0
        %1068 = vmatpush1.bf16.msra.mxu0 %v1044
        %1069 = vmatprep.subr.bf16.mxu0 0
        %1070 = vmatpush1.bf16.msra.mxu0 0
        %1071 = vmatprep.subr.bf16.mxu0 0
        %1072 = vmatpush1.bf16.msra.mxu0 0
        %1073 = vmatprep.subr.bf16.mxu0 0
        %1074 = vmatpush1.bf16.msra.mxu0 0
        %1075 = vmatprep.subr.bf16.mxu0 0
        %1076 = vmatpush1.bf16.msra.mxu0 0
        %1077 = vmatprep.subr.bf16.mxu0 0
        %1078 = vmatpush1.bf16.msra.mxu0 0
        %1079 = vmatprep.subr.bf16.mxu0 0
        %1080 = vmatpush1.bf16.msra.mxu0 0
        %1081 = vmatprep.subr.bf16.mxu0 0
        %1082 = vmatpush1.bf16.msra.mxu0 0
        %1083 = vmatprep.subr.bf16.mxu0 0
        %1084 = vmatpush1.bf16.msra.mxu0 0
        %1085 = vmatprep.mubr.bf16.mxu0 0
        %1086 = vmatmul.mubr.bf16.gmra.mrb[0].mxu0 %v981
        %v1087 = vpop.f32.mrb[0].mxu0
        %v1088 = vadd.f32 0.0, %v1087
        %v1089 = vpop.f32.mrb[0].mxu0
        %v1090 = vpop.f32.mrb[0].mxu0
        %v1091 = vadd.f32 0.0, %v1090
        %v1092 = vpop.f32.mrb[0].mxu0
        %1093 = vmatprep.mubr.bf16.mxu0 0
        %1094 = vmatmul.mubr.bf16.gmra.mrb[0].mxu0 %v982
        %v1095 = vpop.f32.mrb[0].mxu0
        %v1096 = vadd.f32 0.0, %v1095
        %v1097 = vpop.f32.mrb[0].mxu0
        %v1098 = vpop.f32.mrb[0].mxu0
        %v1099 = vadd.f32 0.0, %v1098
        %v1100 = vpop.f32.mrb[0].mxu0
        %1101 = vmatprep.mubr.bf16.mxu0 0
        %1102 = vmatmul.mubr.bf16.gmra.mrb[0].mxu0 %v983
        %v1103 = vpop.f32.mrb[0].mxu0
        %v1104 = vadd.f32 0.0, %v1103
        %v1105 = vpop.f32.mrb[0].mxu0
        %v1106 = vpop.f32.mrb[0].mxu0
        %v1107 = vadd.f32 0.0, %v1106
        %v1108 = vpop.f32.mrb[0].mxu0
        %1109 = vmatprep.mubr.bf16.mxu0 0
        %1110 = vmatmul.mubr.bf16.gmra.mrb[0].mxu0 %v984
        %v1111 = vpop.f32.mrb[0].mxu0
        %v1112 = vadd.f32 0.0, %v1111
        %v1113 = vpop.f32.mrb[0].mxu0
        %v1114 = vpop.f32.mrb[0].mxu0
        %v1115 = vadd.f32 0.0, %v1114
        %v1116 = vpop.f32.mrb[0].mxu0
        %1117 = vmatprep.mubr.bf16.mxu0 0
        %1118 = vmatmul.mubr.bf16.gmra.mrb[0].mxu0 %v985
        %v1119 = vpop.f32.mrb[0].mxu0
        %v1120 = vadd.f32 0.0, %v1119
        %v1121 = vpop.f32.mrb[0].mxu0
        %v1122 = vpop.f32.mrb[0].mxu0
        %v1123 = vadd.f32 0.0, %v1122
        %v1124 = vpop.f32.mrb[0].mxu0
        %1125 = vmatprep.mubr.bf16.mxu0 0
        %1126 = vmatmul.mubr.bf16.gmra.mrb[0].mxu0 %v986
        %v1127 = vpop.f32.mrb[0].mxu0
        %v1128 = vadd.f32 0.0, %v1127
        %v1129 = vpop.f32.mrb[0].mxu0
        %v1130 = vpop.f32.mrb[0].mxu0
        %v1131 = vadd.f32 0.0, %v1130
        %v1132 = vpop.f32.mrb[0].mxu0
        %1133 = vmatprep.mubr.bf16.mxu0 0
        %1134 = vmatmul.mubr.bf16.gmra.mrb[0].mxu0 %v987
        %v1135 = vpop.f32.mrb[0].mxu0
        %v1136 = vadd.f32 0.0, %v1135
        %v1137 = vpop.f32.mrb[0].mxu0
        %v1138 = vpop.f32.mrb[0].mxu0
        %v1139 = vadd.f32 0.0, %v1138
        %v1140 = vpop.f32.mrb[0].mxu0
        %1141 = vmatprep.mubr.bf16.mxu0 0
        %1142 = vmatmul.mubr.bf16.gmra.mrb[0].mxu0 %v988
        %v1143 = vpop.f32.mrb[0].mxu0
        %v1144 = vadd.f32 0.0, %v1143
        %v1145 = vpop.f32.mrb[0].mxu0
        %v1146 = vpop.f32.mrb[0].mxu0
        %v1147 = vadd.f32 0.0, %v1146
        %v1148 = vpop.f32.mrb[0].mxu0
        %1149 = vdwg.mxu0
        %v1150 = vrot.slane %v1088, 4
        %v1151 = vmax.f32 %v1088, %v1150
        %v1152 = vrot.slane %v1151, 2
        %v1153 = vmax.f32 %v1151, %v1152
        %v1154 = vrot.slane %v1153, 1
        %v1155 = vmax.f32 %v1153, %v1154
        %v1156 = vrot.slane %v1091, 4
        %v1157 = vmax.f32 %v1091, %v1156
        %v1158 = vrot.slane %v1157, 2
        %v1159 = vmax.f32 %v1157, %v1158
        %v1160 = vrot.slane %v1159, 1
        %v1161 = vmax.f32 %v1159, %v1160
        %v1162 = vrot.slane %v1096, 4
        %v1163 = vmax.f32 %v1096, %v1162
        %v1164 = vrot.slane %v1163, 2
        %v1165 = vmax.f32 %v1163, %v1164
        %v1166 = vrot.slane %v1165, 1
        %v1167 = vmax.f32 %v1165, %v1166
        %v1168 = vrot.slane %v1099, 4
        %v1169 = vmax.f32 %v1099, %v1168
        %v1170 = vrot.slane %v1169, 2
        %v1171 = vmax.f32 %v1169, %v1170
        %v1172 = vrot.slane %v1171, 1
        %v1173 = vmax.f32 %v1171, %v1172
        %v1174 = vrot.slane %v1104, 4
        %v1175 = vmax.f32 %v1104, %v1174
        %v1176 = vrot.slane %v1175, 2
        %v1177 = vmax.f32 %v1175, %v1176
        %v1178 = vrot.slane %v1177, 1
        %v1179 = vmax.f32 %v1177, %v1178
        %v1180 = vrot.slane %v1107, 4
        %v1181 = vmax.f32 %v1107, %v1180
        %v1182 = vrot.slane %v1181, 2
        %v1183 = vmax.f32 %v1181, %v1182
        %v1184 = vrot.slane %v1183, 1
        %v1185 = vmax.f32 %v1183, %v1184
        %v1186 = vrot.slane %v1112, 4
        %v1187 = vmax.f32 %v1112, %v1186
        %v1188 = vrot.slane %v1187, 2
        %v1189 = vmax.f32 %v1187, %v1188
        %v1190 = vrot.slane %v1189, 1
        %v1191 = vmax.f32 %v1189, %v1190
        %v1192 = vrot.slane %v1115, 4
        %v1193 = vmax.f32 %v1115, %v1192
        %v1194 = vrot.slane %v1193, 2
        %v1195 = vmax.f32 %v1193, %v1194
        %v1196 = vrot.slane %v1195, 1
        %v1197 = vmax.f32 %v1195, %v1196
        %v1198 = vrot.slane %v1120, 4
        %v1199 = vmax.f32 %v1120, %v1198
        %v1200 = vrot.slane %v1199, 2
        %v1201 = vmax.f32 %v1199, %v1200
        %v1202 = vrot.slane %v1201, 1
        %v1203 = vmax.f32 %v1201, %v1202
        %v1204 = vrot.slane %v1123, 4
        %v1205 = vmax.f32 %v1123, %v1204
        %v1206 = vrot.slane %v1205, 2
        %v1207 = vmax.f32 %v1205, %v1206
        %v1208 = vrot.slane %v1207, 1
        %v1209 = vmax.f32 %v1207, %v1208
        %v1210 = vrot.slane %v1128, 4
        %v1211 = vmax.f32 %v1128, %v1210
        %v1212 = vrot.slane %v1211, 2
        %v1213 = vmax.f32 %v1211, %v1212
        %v1214 = vrot.slane %v1213, 1
        %v1215 = vmax.f32 %v1213, %v1214
        %v1216 = vrot.slane %v1131, 4
        %v1217 = vmax.f32 %v1131, %v1216
        %v1218 = vrot.slane %v1217, 2
        %v1219 = vmax.f32 %v1217, %v1218
        %v1220 = vrot.slane %v1219, 1
        %v1221 = vmax.f32 %v1219, %v1220
        %v1222 = vrot.slane %v1136, 4
        %v1223 = vmax.f32 %v1136, %v1222
        %v1224 = vrot.slane %v1223, 2
        %v1225 = vmax.f32 %v1223, %v1224
        %v1226 = vrot.slane %v1225, 1
        %v1227 = vmax.f32 %v1225, %v1226
        %v1228 = vrot.slane %v1139, 4
        %v1229 = vmax.f32 %v1139, %v1228
        %v1230 = vrot.slane %v1229, 2
        %v1231 = vmax.f32 %v1229, %v1230
        %v1232 = vrot.slane %v1231, 1
        %v1233 = vmax.f32 %v1231, %v1232
        %v1234 = vrot.slane %v1144, 4
        %v1235 = vmax.f32 %v1144, %v1234
        %v1236 = vrot.slane %v1235, 2
        %v1237 = vmax.f32 %v1235, %v1236
        %v1238 = vrot.slane %v1237, 1
        %v1239 = vmax.f32 %v1237, %v1238
        %v1240 = vrot.slane %v1147, 4
        %v1241 = vmax.f32 %v1147, %v1240
        %v1242 = vrot.slane %v1241, 2
        %v1243 = vmax.f32 %v1241, %v1242
        %v1244 = vrot.slane %v1243, 1
        %v1245 = vmax.f32 %v1243, %v1244
        %v1246 = vsub.f32 %v1088, %v1155
        %v1247 = vsub.f32 %v1091, %v1161
        %v1248 = vsub.f32 %v1096, %v1167
        %v1249 = vsub.f32 %v1099, %v1173
        %v1250 = vsub.f32 %v1104, %v1179
        %v1251 = vsub.f32 %v1107, %v1185
        %v1252 = vsub.f32 %v1112, %v1191
        %v1253 = vsub.f32 %v1115, %v1197
        %v1254 = vsub.f32 %v1120, %v1203
        %v1255 = vsub.f32 %v1123, %v1209
        %v1256 = vsub.f32 %v1128, %v1215
        %v1257 = vsub.f32 %v1131, %v1221
        %v1258 = vsub.f32 %v1136, %v1227
        %v1259 = vsub.f32 %v1139, %v1233
        %v1260 = vsub.f32 %v1144, %v1239
        %v1261 = vsub.f32 %v1147, %v1245
        %v1262 = vmul.f32 %v1246, 1.442695
        %v1263 = vpow.pop %v1262
        %v1264 = vmul.f32 %v1247, 1.442695
        %v1265 = vpow.pop %v1264
        %v1266 = vmul.f32 %v1248, 1.442695
        %v1267 = vpow.pop %v1266
        %v1268 = vmul.f32 %v1249, 1.442695
        %v1269 = vpow.pop %v1268
        %v1270 = vmul.f32 %v1250, 1.442695
        %v1271 = vpow.pop %v1270
        %v1272 = vmul.f32 %v1251, 1.442695
        %v1273 = vpow.pop %v1272
        %v1274 = vmul.f32 %v1252, 1.442695
        %v1275 = vpow.pop %v1274
        %v1276 = vmul.f32 %v1253, 1.442695
        %v1277 = vpow.pop %v1276
        %v1278 = vmul.f32 %v1254, 1.442695
        %v1279 = vpow.pop %v1278
        %v1280 = vmul.f32 %v1255, 1.442695
        %v1281 = vpow.pop %v1280
        %v1282 = vmul.f32 %v1256, 1.442695
        %v1283 = vpow.pop %v1282
        %v1284 = vmul.f32 %v1257, 1.442695
        %v1285 = vpow.pop %v1284
        %v1286 = vmul.f32 %v1258, 1.442695
        %v1287 = vpow.pop %v1286
        %v1288 = vmul.f32 %v1259, 1.442695
        %v1289 = vpow.pop %v1288
        %v1290 = vmul.f32 %v1260, 1.442695
        %v1291 = vpow.pop %v1290
        %v1292 = vmul.f32 %v1261, 1.442695
        %v1293 = vpow.pop %v1292
        %v1294 = vrot.slane %v1263, 4
        %v1295 = vadd.f32 %v1263, %v1294
        %v1296 = vrot.slane %v1295, 2
        %v1297 = vadd.f32 %v1295, %v1296
        %v1298 = vrot.slane %v1297, 1
        %v1299 = vadd.f32 %v1297, %v1298
        %v1300 = vrot.slane %v1265, 4
        %v1301 = vadd.f32 %v1265, %v1300
        %v1302 = vrot.slane %v1301, 2
        %v1303 = vadd.f32 %v1301, %v1302
        %v1304 = vrot.slane %v1303, 1
        %v1305 = vadd.f32 %v1303, %v1304
        %v1306 = vrot.slane %v1267, 4
        %v1307 = vadd.f32 %v1267, %v1306
        %v1308 = vrot.slane %v1307, 2
        %v1309 = vadd.f32 %v1307, %v1308
        %v1310 = vrot.slane %v1309, 1
        %v1311 = vadd.f32 %v1309, %v1310
        %v1312 = vrot.slane %v1269, 4
        %v1313 = vadd.f32 %v1269, %v1312
        %v1314 = vrot.slane %v1313, 2
        %v1315 = vadd.f32 %v1313, %v1314
        %v1316 = vrot.slane %v1315, 1
        %v1317 = vadd.f32 %v1315, %v1316
        %v1318 = vrot.slane %v1271, 4
        %v1319 = vadd.f32 %v1271, %v1318
        %v1320 = vrot.slane %v1319, 2
        %v1321 = vadd.f32 %v1319, %v1320
        %v1322 = vrot.slane %v1321, 1
        %v1323 = vadd.f32 %v1321, %v1322
        %v1324 = vrot.slane %v1273, 4
        %v1325 = vadd.f32 %v1273, %v1324
        %v1326 = vrot.slane %v1325, 2
        %v1327 = vadd.f32 %v1325, %v1326
        %v1328 = vrot.slane %v1327, 1
        %v1329 = vadd.f32 %v1327, %v1328
        %v1330 = vrot.slane %v1275, 4
        %v1331 = vadd.f32 %v1275, %v1330
        %v1332 = vrot.slane %v1331, 2
        %v1333 = vadd.f32 %v1331, %v1332
        %v1334 = vrot.slane %v1333, 1
        %v1335 = vadd.f32 %v1333, %v1334
        %v1336 = vrot.slane %v1277, 4
        %v1337 = vadd.f32 %v1277, %v1336
        %v1338 = vrot.slane %v1337, 2
        %v1339 = vadd.f32 %v1337, %v1338
        %v1340 = vrot.slane %v1339, 1
        %v1341 = vadd.f32 %v1339, %v1340
        %v1342 = vrot.slane %v1279, 4
        %v1343 = vadd.f32 %v1279, %v1342
        %v1344 = vrot.slane %v1343, 2
        %v1345 = vadd.f32 %v1343, %v1344
        %v1346 = vrot.slane %v1345, 1
        %v1347 = vadd.f32 %v1345, %v1346
        %v1348 = vrot.slane %v1281, 4
        %v1349 = vadd.f32 %v1281, %v1348
        %v1350 = vrot.slane %v1349, 2
        %v1351 = vadd.f32 %v1349, %v1350
        %v1352 = vrot.slane %v1351, 1
        %v1353 = vadd.f32 %v1351, %v1352
        %v1354 = vrot.slane %v1283, 4
        %v1355 = vadd.f32 %v1283, %v1354
        %v1356 = vrot.slane %v1355, 2
        %v1357 = vadd.f32 %v1355, %v1356
        %v1358 = vrot.slane %v1357, 1
        %v1359 = vadd.f32 %v1357, %v1358
        %v1360 = vrot.slane %v1285, 4
        %v1361 = vadd.f32 %v1285, %v1360
        %v1362 = vrot.slane %v1361, 2
        %v1363 = vadd.f32 %v1361, %v1362
        %v1364 = vrot.slane %v1363, 1
        %v1365 = vadd.f32 %v1363, %v1364
        %v1366 = vrot.slane %v1287, 4
        %v1367 = vadd.f32 %v1287, %v1366
        %v1368 = vrot.slane %v1367, 2
        %v1369 = vadd.f32 %v1367, %v1368
        %v1370 = vrot.slane %v1369, 1
        %v1371 = vadd.f32 %v1369, %v1370
        %v1372 = vrot.slane %v1289, 4
        %v1373 = vadd.f32 %v1289, %v1372
        %v1374 = vrot.slane %v1373, 2
        %v1375 = vadd.f32 %v1373, %v1374
        %v1376 = vrot.slane %v1375, 1
        %v1377 = vadd.f32 %v1375, %v1376
        %v1378 = vrot.slane %v1291, 4
        %v1379 = vadd.f32 %v1291, %v1378
        %v1380 = vrot.slane %v1379, 2
        %v1381 = vadd.f32 %v1379, %v1380
        %v1382 = vrot.slane %v1381, 1
        %v1383 = vadd.f32 %v1381, %v1382
        %v1384 = vrot.slane %v1293, 4
        %v1385 = vadd.f32 %v1293, %v1384
        %v1386 = vrot.slane %v1385, 2
        %v1387 = vadd.f32 %v1385, %v1386
        %v1388 = vrot.slane %v1387, 1
        %v1389 = vadd.f32 %v1387, %v1388
        %v1390 = vmul.f32 %v1263, %v709
        %v1391 = vmul.f32 %v1265, %v713
        %v1392 = vmul.f32 %v1267, %v719
        %v1393 = vmul.f32 %v1269, %v723
        %v1394 = vmul.f32 %v1271, %v729
        %v1395 = vmul.f32 %v1273, %v733
        %v1396 = vmul.f32 %v1275, %v739
        %v1397 = vmul.f32 %v1277, %v743
        %v1398 = vmul.f32 %v1279, %v749
        %v1399 = vmul.f32 %v1281, %v753
        %v1400 = vmul.f32 %v1283, %v759
        %v1401 = vmul.f32 %v1285, %v763
        %v1402 = vmul.f32 %v1287, %v769
        %v1403 = vmul.f32 %v1289, %v773
        %v1404 = vmul.f32 %v1291, %v779
        %v1405 = vmul.f32 %v1293, %v783
        %v1406 = vrot.slane %v1390, 4
        %v1407 = vadd.f32 %v1390, %v1406
        %v1408 = vrot.slane %v1407, 2
        %v1409 = vadd.f32 %v1407, %v1408
        %v1410 = vrot.slane %v1409, 1
        %v1411 = vadd.f32 %v1409, %v1410
        %v1412 = vrot.slane %v1391, 4
        %v1413 = vadd.f32 %v1391, %v1412
        %v1414 = vrot.slane %v1413, 2
        %v1415 = vadd.f32 %v1413, %v1414
        %v1416 = vrot.slane %v1415, 1
        %v1417 = vadd.f32 %v1415, %v1416
        %v1418 = vrot.slane %v1392, 4
        %v1419 = vadd.f32 %v1392, %v1418
        %v1420 = vrot.slane %v1419, 2
        %v1421 = vadd.f32 %v1419, %v1420
        %v1422 = vrot.slane %v1421, 1
        %v1423 = vadd.f32 %v1421, %v1422
        %v1424 = vrot.slane %v1393, 4
        %v1425 = vadd.f32 %v1393, %v1424
        %v1426 = vrot.slane %v1425, 2
        %v1427 = vadd.f32 %v1425, %v1426
        %v1428 = vrot.slane %v1427, 1
        %v1429 = vadd.f32 %v1427, %v1428
        %v1430 = vrot.slane %v1394, 4
        %v1431 = vadd.f32 %v1394, %v1430
        %v1432 = vrot.slane %v1431, 2
        %v1433 = vadd.f32 %v1431, %v1432
        %v1434 = vrot.slane %v1433, 1
        %v1435 = vadd.f32 %v1433, %v1434
        %v1436 = vrot.slane %v1395, 4
        %v1437 = vadd.f32 %v1395, %v1436
        %v1438 = vrot.slane %v1437, 2
        %v1439 = vadd.f32 %v1437, %v1438
        %v1440 = vrot.slane %v1439, 1
        %v1441 = vadd.f32 %v1439, %v1440
        %v1442 = vrot.slane %v1396, 4
        %v1443 = vadd.f32 %v1396, %v1442
        %v1444 = vrot.slane %v1443, 2
        %v1445 = vadd.f32 %v1443, %v1444
        %v1446 = vrot.slane %v1445, 1
        %v1447 = vadd.f32 %v1445, %v1446
        %v1448 = vrot.slane %v1397, 4
        %v1449 = vadd.f32 %v1397, %v1448
        %v1450 = vrot.slane %v1449, 2
        %v1451 = vadd.f32 %v1449, %v1450
        %v1452 = vrot.slane %v1451, 1
        %v1453 = vadd.f32 %v1451, %v1452
        %v1454 = vrot.slane %v1398, 4
        %v1455 = vadd.f32 %v1398, %v1454
        %v1456 = vrot.slane %v1455, 2
        %v1457 = vadd.f32 %v1455, %v1456
        %v1458 = vrot.slane %v1457, 1
        %v1459 = vadd.f32 %v1457, %v1458
        %v1460 = vrot.slane %v1399, 4
        %v1461 = vadd.f32 %v1399, %v1460
        %v1462 = vrot.slane %v1461, 2
        %v1463 = vadd.f32 %v1461, %v1462
        %v1464 = vrot.slane %v1463, 1
        %v1465 = vadd.f32 %v1463, %v1464
        %v1466 = vrot.slane %v1400, 4
        %v1467 = vadd.f32 %v1400, %v1466
        %v1468 = vrot.slane %v1467, 2
        %v1469 = vadd.f32 %v1467, %v1468
        %v1470 = vrot.slane %v1469, 1
        %v1471 = vadd.f32 %v1469, %v1470
        %v1472 = vrot.slane %v1401, 4
        %v1473 = vadd.f32 %v1401, %v1472
        %v1474 = vrot.slane %v1473, 2
        %v1475 = vadd.f32 %v1473, %v1474
        %v1476 = vrot.slane %v1475, 1
        %v1477 = vadd.f32 %v1475, %v1476
        %v1478 = vrot.slane %v1402, 4
        %v1479 = vadd.f32 %v1402, %v1478
        %v1480 = vrot.slane %v1479, 2
        %v1481 = vadd.f32 %v1479, %v1480
        %v1482 = vrot.slane %v1481, 1
        %v1483 = vadd.f32 %v1481, %v1482
        %v1484 = vrot.slane %v1403, 4
        %v1485 = vadd.f32 %v1403, %v1484
        %v1486 = vrot.slane %v1485, 2
        %v1487 = vadd.f32 %v1485, %v1486
        %v1488 = vrot.slane %v1487, 1
        %v1489 = vadd.f32 %v1487, %v1488
        %v1490 = vrot.slane %v1404, 4
        %v1491 = vadd.f32 %v1404, %v1490
        %v1492 = vrot.slane %v1491, 2
        %v1493 = vadd.f32 %v1491, %v1492
        %v1494 = vrot.slane %v1493, 1
        %v1495 = vadd.f32 %v1493, %v1494
        %v1496 = vrot.slane %v1405, 4
        %v1497 = vadd.f32 %v1405, %v1496
        %v1498 = vrot.slane %v1497, 2
        %v1499 = vadd.f32 %v1497, %v1498
        %v1500 = vrot.slane %v1499, 1
        %v1501 = vadd.f32 %v1499, %v1500
        %v1502 = vrcp.pop %v1299
        %v1503 = vrcp.pop %v1305
        %v1504 = vrcp.pop %v1311
        %v1505 = vrcp.pop %v1317
        %v1506 = vrcp.pop %v1323
        %v1507 = vrcp.pop %v1329
        %v1508 = vrcp.pop %v1335
        %v1509 = vrcp.pop %v1341
        %v1510 = vrcp.pop %v1347
        %v1511 = vrcp.pop %v1353
        %v1512 = vrcp.pop %v1359
        %v1513 = vrcp.pop %v1365
        %v1514 = vrcp.pop %v1371
        %v1515 = vrcp.pop %v1377
        %v1516 = vrcp.pop %v1383
        %v1517 = vrcp.pop %v1389
        %v1518 = vmul.f32 %v1411, %v1502
        %v1519 = vmul.f32 %v1417, %v1503
        %v1520 = vmul.f32 %v1423, %v1504
        %v1521 = vmul.f32 %v1429, %v1505
        %v1522 = vmul.f32 %v1435, %v1506
        %v1523 = vmul.f32 %v1441, %v1507
        %v1524 = vmul.f32 %v1447, %v1508
        %v1525 = vmul.f32 %v1453, %v1509
        %v1526 = vmul.f32 %v1459, %v1510
        %v1527 = vmul.f32 %v1465, %v1511
        %v1528 = vmul.f32 %v1471, %v1512
        %v1529 = vmul.f32 %v1477, %v1513
        %v1530 = vmul.f32 %v1483, %v1514
        %v1531 = vmul.f32 %v1489, %v1515
        %v1532 = vmul.f32 %v1495, %v1516
        %v1533 = vmul.f32 %v1501, %v1517
        %v1534 = vpack.c.bf16 %v1518, %v1518
        %v1535 = vpack.c.bf16 %v1519, %v1519
        %v1536 = vpack.c.bf16 %v1520, %v1520
        %v1537 = vpack.c.bf16 %v1521, %v1521
        %v1538 = vpack.c.bf16 %v1522, %v1522
        %v1539 = vpack.c.bf16 %v1523, %v1523
        %v1540 = vpack.c.bf16 %v1524, %v1524
        %v1541 = vpack.c.bf16 %v1525, %v1525
        %v1542 = vpack.c.bf16 %v1526, %v1526
        %v1543 = vpack.c.bf16 %v1527, %v1527
        %v1544 = vpack.c.bf16 %v1528, %v1528
        %v1545 = vpack.c.bf16 %v1529, %v1529
        %v1546 = vpack.c.bf16 %v1530, %v1530
        %v1547 = vpack.c.bf16 %v1531, %v1531
        %v1548 = vpack.c.bf16 %v1532, %v1532
        %v1549 = vpack.c.bf16 %v1533, %v1533
        %v1550 = vld [vmem:[#allocation10] sm:$0xf]
        %v1551 = vld [vmem:[#allocation10 + $0x4] sm:$0xf]
        %v1552 = vld [vmem:[#allocation10 + $0x8] sm:$0xf]
        %v1553 = vld [vmem:[#allocation10 + $0xc] sm:$0xf]
        %v1554 = vld [vmem:[#allocation10 + $0x10] sm:$0xf]
        %v1555 = vld [vmem:[#allocation10 + $0x14] sm:$0xf]
        %v1556 = vld [vmem:[#allocation10 + $0x18] sm:$0xf]
        %v1557 = vld [vmem:[#allocation10 + $0x1c] sm:$0xf]
        %v1558 = vld [vmem:[#allocation10 + $0x20] sm:$0xf]
        %v1559 = vld [vmem:[#allocation10 + $0x24] sm:$0xf]
        %v1560 = vld [vmem:[#allocation10 + $0x28] sm:$0xf]
        %v1561 = vld [vmem:[#allocation10 + $0x2c] sm:$0xf]
        %v1562 = vld [vmem:[#allocation10 + $0x30] sm:$0xf]
        %v1563 = vld [vmem:[#allocation10 + $0x34] sm:$0xf]
        %v1564 = vld [vmem:[#allocation10 + $0x38] sm:$0xf]
        %v1565 = vld [vmem:[#allocation10 + $0x3c] sm:$0xf]
        %v1566 = vld [vmem:[%s5] sm:$0x1]
        %v1568 = vlaneseq
        %v1569 = vshrl.u32 %v1568, 7
        %v1570 = vsub.s32 0, %v1569
        %v1571 = vrot.slane %v1566, %v1570
        %v1589 = vunpack.c.l.b16 %v1534
        %v1590 = vunpack.c.l.b16 %v1535
        %v1591 = vunpack.c.l.b16 %v1536
        %v1592 = vunpack.c.l.b16 %v1537
        %v1593 = vunpack.c.l.b16 %v1538
        %v1594 = vunpack.c.l.b16 %v1539
        %v1595 = vunpack.c.l.b16 %v1540
        %v1596 = vunpack.c.l.b16 %v1541
        %v1597 = vunpack.c.l.b16 %v1542
        %v1598 = vunpack.c.l.b16 %v1543
        %v1599 = vunpack.c.l.b16 %v1544
        %v1600 = vunpack.c.l.b16 %v1545
        %v1601 = vunpack.c.l.b16 %v1546
        %v1602 = vunpack.c.l.b16 %v1547
        %v1603 = vunpack.c.l.b16 %v1548
        %v1604 = vunpack.c.l.b16 %v1549
        %vm1605 = vcmask 1041409
        %v1606 = vsel %vm1605, %v1590, %v1589
        %vm1607 = vcmask 1042434
        %v1608 = vsel %vm1607, %v1591, %v1606
        %vm1609 = vcmask 1043459
        %v1610 = vsel %vm1609, %v1592, %v1608
        %vm1611 = vcmask 1044484
        %v1612 = vsel %vm1611, %v1593, %v1610
        %vm1613 = vcmask 1045509
        %v1614 = vsel %vm1613, %v1594, %v1612
        %vm1615 = vcmask 1046534
        %v1616 = vsel %vm1615, %v1595, %v1614
        %vm1617 = vcmask 1047559
        %v1618 = vsel %vm1617, %v1596, %v1616
        %v1619 = vsel %vm1605, %v1598, %v1597
        %v1620 = vsel %vm1607, %v1599, %v1619
        %v1621 = vsel %vm1609, %v1600, %v1620
        %v1622 = vsel %vm1611, %v1601, %v1621
        %v1623 = vsel %vm1613, %v1602, %v1622
        %v1624 = vsel %vm1615, %v1603, %v1623
        %v1625 = vsel %vm1617, %v1604, %v1624
        %v1626 = vpack.c.b16 %v1625, %v1618
        %v1644 = vunpack.c.l.b16 %v1550
        %v1645 = vunpack.c.l.b16 %v1551
        %v1646 = vunpack.c.l.b16 %v1552
        %v1647 = vunpack.c.l.b16 %v1553
        %v1648 = vunpack.c.l.b16 %v1554
        %v1649 = vunpack.c.l.b16 %v1555
        %v1650 = vunpack.c.l.b16 %v1556
        %v1651 = vunpack.c.l.b16 %v1557
        %v1652 = vunpack.c.l.b16 %v1558
        %v1653 = vunpack.c.l.b16 %v1559
        %v1654 = vunpack.c.l.b16 %v1560
        %v1655 = vunpack.c.l.b16 %v1561
        %v1656 = vunpack.c.l.b16 %v1562
        %v1657 = vunpack.c.l.b16 %v1563
        %v1658 = vunpack.c.l.b16 %v1564
        %v1659 = vunpack.c.l.b16 %v1565
        %v1660 = vpack.c.b16 %v1645, %v1644
        %v1661 = vpack.c.b16 %v1647, %v1646
        %v1662 = vpack.c.b16 %v1649, %v1648
        %v1663 = vpack.c.b16 %v1651, %v1650
        %v1664 = vpack.c.b16 %v1653, %v1652
        %v1665 = vpack.c.b16 %v1655, %v1654
        %v1666 = vpack.c.b16 %v1657, %v1656
        %v1667 = vpack.c.b16 %v1659, %v1658
        %1676 = vmatprep.subr.bf16.mxu0 0
        %1677 = vmatpush1.bf16.msra.mxu0 %v1660
        %1678 = vmatprep.subr.bf16.mxu0 0
        %1679 = vmatpush1.bf16.msra.mxu0 %v1661
        %1680 = vmatprep.subr.bf16.mxu0 0
        %1681 = vmatpush1.bf16.msra.mxu0 %v1662
        %1682 = vmatprep.subr.bf16.mxu0 0
        %1683 = vmatpush1.bf16.msra.mxu0 %v1663
        %1684 = vmatprep.subr.bf16.mxu0 0
        %1685 = vmatpush1.bf16.msra.mxu0 %v1664
        %1686 = vmatprep.subr.bf16.mxu0 0
        %1687 = vmatpush1.bf16.msra.mxu0 %v1665
        %1688 = vmatprep.subr.bf16.mxu0 0
        %1689 = vmatpush1.bf16.msra.mxu0 %v1666
        %1690 = vmatprep.subr.bf16.mxu0 0
        %1691 = vmatpush1.bf16.msra.mxu0 %v1667
        %1692 = vmatprep.subr.bf16.mxu0 0
        %1693 = vmatpush1.bf16.msra.mxu0 0
        %1694 = vmatprep.subr.bf16.mxu0 0
        %1695 = vmatpush1.bf16.msra.mxu0 0
        %1696 = vmatprep.subr.bf16.mxu0 0
        %1697 = vmatpush1.bf16.msra.mxu0 0
        %1698 = vmatprep.subr.bf16.mxu0 0
        %1699 = vmatpush1.bf16.msra.mxu0 0
        %1700 = vmatprep.subr.bf16.mxu0 0
        %1701 = vmatpush1.bf16.msra.mxu0 0
        %1702 = vmatprep.subr.bf16.mxu0 0
        %1703 = vmatpush1.bf16.msra.mxu0 0
        %1704 = vmatprep.subr.bf16.mxu0 0
        %1705 = vmatpush1.bf16.msra.mxu0 0
        %1706 = vmatprep.subr.bf16.mxu0 0
        %1707 = vmatpush1.bf16.msra.mxu0 0
        %1708 = vmatprep.mubr.bf16.mxu0 0
        %1709 = vmatmul.mubr.bf16.gmra.mrb[0].mxu0 %v1626
        %v1710 = vpop.f32.mrb[0].mxu0
        %v1711 = vadd.f32 %v1571, %v1710
        %v1712 = vpop.f32.mrb[0].mxu0
        %v1713 = vpop.f32.mrb[0].mxu0
        %v1714 = vadd.f32 %v1571, %v1713
        %v1715 = vpop.f32.mrb[0].mxu0
        %1716 = vdwg.mxu0
        %v1717 = vpack.c.bf16 %v1714, %v1711
        %v1719 = vunpack.c.l.b16 %v1717
        %v1720 = vunpack.c.h.b16 %v1717
        %v1721 = vpack.c.b16 %v1719, %v1719
        %v1722 = vpack.c.b16 %v1720, %v1720
        %1725 = vst [vmem:[%s394] sm:$0xf] %v1721
        %1726 = vst [vmem:[%s394 + $0x4] sm:$0xf] %v1722
        %s1727 = sand.u32 %s194, 1
        %s1728 = scalar_lea.sflag [#allocation4], %s1727
        %s1729 = sand.u32 %s194, 1
        %s1730 = smul.addr %s1729, 8
        %s1731 = scalar_lea.vmem [#allocation13], %s1730
        // Predicated region
        $region73: #{tpu_custom_call.1} parent=47 // pred_check
          %p1732 = pneg %p204
        $region74: #{tpu_custom_call.1} parent=47 // pred_check_branch
          %1734 = sbr.rel (%p1732) target = $region76
        $region75: #{tpu_custom_call.1} parent=47 // pred_region
          %s1735 = smul.u32 2, %s29
          %s1737 = ssub.s32 128, 128
          %1738 = vsyncadd %s1728, %s1737
          %s1739 = smul.addr %s1735, 64
          %s1740 = scalar_lea.hbm %s7, %s1739
          %s1741 = sshll.u32 %s1731, 4
          %s1742 = int_to_ptr.vmem [resolvable:$true] %s1741
          %1747 = dma.vmem_to_hbm [thread:$0]  %s1742, 128, %s1740, %s1728, 64, 64, 4
        $region76: #{tpu_custom_call.1} parent=47 // pred_fallthru
          _
      $region48: #{tpu_custom_call.1} parent=5 // pred_fallthru
        _
      %p1748 = scmp.le.s32.totalorder 2, %s24
      // Predicated region
      $region77: #{tpu_custom_call.1} parent=5 // pred_check
        %p1749 = pneg %p1748
      $region78: #{tpu_custom_call.1} parent=5 // pred_check_branch
        %1751 = sbr.rel (%p1749) target = $region80
      $region79: #{tpu_custom_call.1} parent=5 // pred_region
        %s1752 = ssub.s32 %s24, 2
        // Predicated region
        $region81: #{tpu_custom_call.1} parent=79 // pred_check
          %p1753 = pneg %p210
        $region82: #{tpu_custom_call.1} parent=79 // pred_check_branch
          %1755 = sbr.rel (%p1753) target = $region84
        $region83: #{tpu_custom_call.1} parent=79 // pred_region
          %s1756 = sand.u32 %s195, 1
          %s1757 = scalar_lea.sflag [#allocation4], %s1756
          %s1758 = sand.u32 %s195, 1
          %s1759 = smul.addr %s1758, 8
          %s1760 = scalar_lea.vmem [#allocation13], %s1759
          %1761 = dma.done %s1757, 128
        $region84: #{tpu_custom_call.1} parent=79 // pred_fallthru
          _
      $region80: #{tpu_custom_call.1} parent=5 // pred_fallthru
        _
    $region6: #{tpu_custom_call.1} parent=1 // loop_footer
      %s28 = sadd.s32 1, %s24
    $region7: #{tpu_custom_call.1} parent=1 // loop_footer_branch
      %23 = sbr.rel target = $region3
    $region8: #{tpu_custom_call.1} parent=1 // loop_exit
      _
    %1762 = vsyncpa [#allocation3], 1
    %s1763 = scalar_lea.sflag [#allocation3], 1
    %1764 = vsyncpa %s1763, 1
    %1765 = vsyncpa [#allocation6], 1
    %s1766 = scalar_lea.sflag [#allocation6], 1
    %1767 = vsyncpa %s1766, 1
    %1768 = vsyncpa [#allocation9], 1
    %1769 = vsyncpa [#allocation12], 1
    %1770 = vsyncpa [#allocation4], 1
    %s1771 = scalar_lea.sflag [#allocation4], 1
    %1772 = vsyncpa %s1771, 1

</llo_original>
